<compile_context>
chip_gen: v7x
topology: tpu7x:2x2x1
jax: 0.10.0
libtpu: 0.0.40
codegen_flags: <defaults>
</compile_context>

<pallas_src>
import functools

import jax
import jax.numpy as jnp
from jax import lax
from jax.experimental import pallas as pl
from jax.experimental.pallas import tpu as pltpu


# ---------------------------------------------------------------------------
# Kernel 1: local_nn MLP over all N source points (computed exactly once).
# ---------------------------------------------------------------------------
def _mlp_kernel(x_ref, w1_ref, b1_ref, w2_ref, b2_ref, h_ref):
    h = jnp.dot(x_ref[...], w1_ref[...], preferred_element_type=jnp.float32)
    h = jnp.maximum(h + b1_ref[...], 0.0)
    h = jnp.dot(h, w2_ref[...], preferred_element_type=jnp.float32)
    h_ref[...] = jnp.maximum(h + b2_ref[...], 0.0)


def mlp_pallas(x, params, *, tile=512):
    n, c_in = x.shape
    hid = params["w1"].shape[1]
    c_out = params["w2"].shape[1]
    tile = min(tile, n)
    assert n % tile == 0
    return pl.pallas_call(
        _mlp_kernel,
        out_shape=jax.ShapeDtypeStruct((n, c_out), jnp.float32),
        grid=(n // tile,),
        in_specs=[
            pl.BlockSpec((tile, c_in), lambda i: (i, 0)),
            pl.BlockSpec((c_in, hid), lambda i: (0, 0)),
            pl.BlockSpec((1, hid), lambda i: (0, 0)),
            pl.BlockSpec((hid, c_out), lambda i: (0, 0)),
            pl.BlockSpec((1, c_out), lambda i: (0, 0)),
        ],
        out_specs=pl.BlockSpec((tile, c_out), lambda i: (i, 0)),
        compiler_params=pltpu.CompilerParams(dimension_semantics=("parallel",)),
    )(x.astype(jnp.float32), params["w1"], params["b1"], params["w2"], params["b2"])


# ---------------------------------------------------------------------------
# Kernel 2: radius neighbourhood (same cloud only) + 64-cap + max aggregation.
# Grid = (M // TM  [parallel over query tiles],  NB // TN  [arbitrary, carried]).
# ---------------------------------------------------------------------------
def _sa_agg_kernel(q_ref, src_ref, h_ref, lower_ref, out_ref, acc_ref, cnt_ref,
                   *, r2, max_nbrs):
    nk = pl.program_id(1)

    @pl.when(nk == 0)
    def _init():
        acc_ref[...] = jnp.full_like(acc_ref, -jnp.inf)
        cnt_ref[...] = jnp.zeros_like(cnt_ref)

    q = q_ref[...]                                       # (4, TM): rows 0-2 pos_s^T, row 3 batch_s
    src = src_ref[...]                                   # (TN, 4): cols 0-2 pos, col 3 batch

    # --- pairwise squared distances (chunk x queries), 3 VPU FMAs, lane-dense (TN, TM) ---
    d0 = src[:, 0:1] - q[0:1, :]
    d1 = src[:, 1:2] - q[1:2, :]
    d2 = src[:, 2:3] - q[2:3, :]
    dist2 = d0 * d0 + d1 * d1 + d2 * d2                  # (TN, TM)

    same = src[:, 3:4] == q[3:4, :]                      # safety net (chunks already same-cloud)
    valid = (dist2 <= r2) & same
    validf = valid.astype(jnp.bfloat16)

    # --- neighbour cap: keep first `max_nbrs` valid source indices per query.
    # Carried running valid-count + in-chunk inclusive cumsum via a resident bf16 triangular
    # constant x (TN, TM) matmul (f32 accumulation -> ranks are exact integers).
    tn = validf.shape[0]
    rank = jnp.dot(lower_ref[...], validf, preferred_element_type=jnp.float32)  # (TN, TM)
    rank = rank + cnt_ref[...]                           # add valid count of earlier chunks
    cnt_ref[...] = rank[tn - 1:tn, :]                    # last row == updated running count
    keep = valid & (rank <= float(max_nbrs))             # (TN, TM)

    # --- masked running max, channel loop over lane-dense (TN, TM) tiles, transposed acc ---
    h = h_ref[...]                                       # (TN, C_OUT)
    c_out = h.shape[1]
    rows = []
    for c in range(c_out):                               # static unroll, C_OUT iterations
        vals = jnp.where(keep, h[:, c:c + 1], -jnp.inf)  # (TN, TM)
        rows.append(jnp.max(vals, axis=0, keepdims=True))  # (1, TM)
    new_max = jnp.concatenate(rows, axis=0)              # (C_OUT, TM)
    acc_ref[...] = jnp.maximum(acc_ref[...], new_max)

    @pl.when(nk == pl.num_programs(1) - 1)
    def _finalize():
        res = acc_ref[...]
        # PyG max-aggregation fallback for isolated nodes (unreachable here: every sampled
        # point is its own neighbour); keeps the output finite in all cases.
        out_ref[...] = jnp.where(res > -jnp.inf, res, 0.0)


def sa_conv_pallas(h, pos, batch, pos_s, batch_s, *, r, max_nbrs,
                   points_per_cloud, samples_per_cloud, tile_m=None, tile_n=None):
    n, c_out = h.shape
    m = pos_s.shape[0]
    nb = points_per_cloud
    mpc = samples_per_cloud
    assert n % nb == 0 and m % mpc == 0 and n // nb == m // mpc

    if tile_m is None:
        tile_m = min(128, mpc)        # keeps >=2 parallel query tiles for v7x megacore
    if tile_n is None:
        tile_n = nb                   # whole cloud per chunk (VMEM use is tiny)
    assert mpc % tile_m == 0 and nb % tile_n == 0
    assert (tile_m % 128 == 0) or tile_m == m
    assert tile_n % 8 == 0

    tiles_per_cloud_q = mpc // tile_m
    chunks_per_cloud = nb // tile_n

    # Pack query pos^T (+ batch) and source pos (+ batch) to cut small lane-sparse DMAs.
    q = jnp.concatenate([pos_s.T.astype(jnp.float32),
                         batch_s.reshape(1, m).astype(jnp.float32)], axis=0)      # (4, M)
    src = jnp.concatenate([pos.astype(jnp.float32),
                           batch.reshape(n, 1).astype(jnp.float32)], axis=1)      # (N, 4)
    lower = jnp.tril(jnp.ones((tile_n, tile_n), jnp.bfloat16))                    # resident constant

    def chunk_map(qi, nk):
        # restrict source chunks to the query tile's own cloud (clouds contiguous, equal-sized)
        return (qi // tiles_per_cloud_q * chunks_per_cloud + nk, 0)

    kernel = functools.partial(_sa_agg_kernel, r2=float(r) ** 2, max_nbrs=max_nbrs)

    out = pl.pallas_call(
        kernel,
        out_shape=jax.ShapeDtypeStruct((c_out, m), jnp.float32),   # lane-dense: queries on lanes
        grid=(m // tile_m, nb // tile_n),
        in_specs=[
            pl.BlockSpec((4, tile_m), lambda qi, nk: (0, qi)),     # packed query pos^T + batch
            pl.BlockSpec((tile_n, 4), chunk_map),                  # packed source pos + batch
            pl.BlockSpec((tile_n, c_out), chunk_map),              # h chunk (precomputed MLP)
            pl.BlockSpec((tile_n, tile_n), lambda qi, nk: (0, 0)), # resident triangular constant
        ],
        out_specs=pl.BlockSpec((c_out, tile_m), lambda qi, nk: (0, qi)),
        scratch_shapes=[
            pltpu.VMEM((c_out, tile_m), jnp.float32),   # transposed running-max accumulator
            pltpu.VMEM((1, tile_m), jnp.float32),       # carried valid-neighbour count
        ],
        compiler_params=pltpu.CompilerParams(
            dimension_semantics=("parallel", "arbitrary")),
    )(q, src, h, lower)
    return out.T                                                   # (M, C_OUT)


# ---------------------------------------------------------------------------
# fps (farthest point sampling) — sequential / data-dependent, kept in plain JAX.
# ---------------------------------------------------------------------------
def _fps_single(pos_b, m):
    n = pos_b.shape[0]
    sel0 = jnp.zeros((m,), jnp.int32)                 # deterministic start at index 0
    dist0 = jnp.full((n,), jnp.inf, jnp.float32)

    def body(k, state):
        dist, sel = state
        last = sel[k - 1]
        d = jnp.sum((pos_b - pos_b[last]) ** 2, axis=-1)
        dist = jnp.minimum(dist, d)
        nxt = jnp.argmax(dist).astype(jnp.int32)
        return dist, sel.at[k].set(nxt)

    _, sel = lax.fori_loop(1, m, body, (dist0, sel0))
    return sel


def fps_jax(pos, num_batches, points_per_batch, ratio):
    m_per_batch = int(points_per_batch * ratio)
    pos_b = pos.reshape(num_batches, points_per_batch, -1)
    sel = jax.vmap(lambda p: _fps_single(p, m_per_batch))(pos_b)   # (B, m)
    offsets = (jnp.arange(num_batches, dtype=jnp.int32) * points_per_batch)[:, None]
    return (sel + offsets).reshape(-1)


# ---------------------------------------------------------------------------
# SAModule_NoCoords forward
# ---------------------------------------------------------------------------
def sa_module_nocoords(x, pos, batch, params, *, ratio, r,
                       num_batches, points_per_batch, max_nbrs=64):
    idx = fps_jax(pos, num_batches, points_per_batch, ratio)
    pos_s = pos[idx]
    batch_s = batch[idx]
    h = mlp_pallas(x, params)                                      # local_nn once over all N
    out = sa_conv_pallas(
        h, pos, batch, pos_s, batch_s, r=r, max_nbrs=max_nbrs,
        points_per_cloud=points_per_batch,
        samples_per_cloud=int(points_per_batch * ratio))
    return out, pos_s, batch_s


# ---------------------------------------------------------------------------
# Pure-JAX reference of the same forward pass (for a correctness cross-check).
# ---------------------------------------------------------------------------
def sa_module_reference(x, pos, batch, idx, params, *, r, max_nbrs):
    h = jnp.maximum(x @ params["w1"] + params["b1"], 0.0)
    h = jnp.maximum(h @ params["w2"] + params["b2"], 0.0)            # (N, C_OUT)
    pos_s, bat_s = pos[idx], batch[idx]
    diff = pos[None, :, :] - pos_s[:, None, :]                       # same op order as kernel
    d2 = diff[..., 0] ** 2 + diff[..., 1] ** 2 + diff[..., 2] ** 2   # (M, N)
    valid = (d2 <= r * r) & (bat_s[:, None] == batch[None, :])
    rank = jnp.cumsum(valid.astype(jnp.int32), axis=1)
    keep = valid & (rank <= max_nbrs)
    vals = jnp.where(keep[:, :, None], h[None, :, :], -jnp.inf)
    out = jnp.max(vals, axis=1)
    return jnp.where(jnp.isfinite(out), out, 0.0)


if __name__ == "__main__":
    B = 2                 # point clouds in the batch
    NB = 512              # points per cloud
    N = B * NB            # 1024 total points
    C_IN = 16             # input feature channels
    HID = 32              # hidden width of local_nn
    C_OUT = 32            # output channels of local_nn
    RATIO = 0.25          # fps ratio -> 128 sampled points per cloud, M = 256
    R = 0.5               # radius
    MAX_NBRS = 64

    key = jax.random.PRNGKey(0)
    kx, kp, kw1, kw2 = jax.random.split(key, 4)

    x = jax.random.normal(kx, (N, C_IN), jnp.float32)
    pos = jax.random.uniform(kp, (N, 3), jnp.float32)
    batch = jnp.repeat(jnp.arange(B, dtype=jnp.int32), NB)

    params = {
        "w1": jax.random.normal(kw1, (C_IN, HID), jnp.float32) * 0.1,
        "b1": jnp.zeros((1, HID), jnp.float32),
        "w2": jax.random.normal(kw2, (HID, C_OUT), jnp.float32) * 0.1,
        "b2": jnp.zeros((1, C_OUT), jnp.float32),
    }

    out, pos_s, batch_s = sa_module_nocoords(
        x, pos, batch, params, ratio=RATIO, r=R,
        num_batches=B, points_per_batch=NB, max_nbrs=MAX_NBRS)

    out = jax.block_until_ready(out)
    pos_s = jax.block_until_ready(pos_s)
    batch_s = jax.block_until_ready(batch_s)

    M = int(N * RATIO)
    assert out.shape == (M, C_OUT)
    assert pos_s.shape == (M, 3)
    assert batch_s.shape == (M,)
    assert bool(jnp.all(jnp.isfinite(out)))

    # cross-check against the pure-JAX reference (MXU vs XLA matmul precision -> loose tol)
    idx = fps_jax(pos, B, NB, RATIO)
    ref = sa_module_reference(x, pos, batch, idx, params, r=R, max_nbrs=MAX_NBRS)
    assert bool(jnp.allclose(out, ref, atol=2e-2, rtol=2e-2)), \
        float(jnp.max(jnp.abs(out - ref)))

    print("KERNEL_OK")
</pallas_src>

<mosaic_0001>
module attributes {stable_mosaic.version = 11 : i64} {
  func.func @_mlp_kernel(%arg0: i32, %arg1: memref<512x16xf32, #tpu.memory_space<vmem>>, %arg2: memref<16x32xf32, #tpu.memory_space<vmem>>, %arg3: memref<1x32xf32, #tpu.memory_space<vmem>>, %arg4: memref<32x32xf32, #tpu.memory_space<vmem>>, %arg5: memref<1x32xf32, #tpu.memory_space<vmem>>, %arg6: memref<512x32xf32, #tpu.memory_space<vmem>>) attributes {dimension_semantics = [#tpu.dimension_semantics<parallel>], iteration_bounds = array<i64: 2>, scalar_prefetch = 0 : i64, scratch_operands = 0 : i64, tpu.core_type = #tpu.core_type<tc>, window_params = [{transform_indices = @transform_0, window_bounds = array<i64: 512, 16>}, {pipeline_mode = #tpu.pipeline_mode<synchronous>, transform_indices = @transform_1, window_bounds = array<i64: 16, 32>}, {pipeline_mode = #tpu.pipeline_mode<synchronous>, transform_indices = @transform_2, window_bounds = array<i64: 1, 32>}, {pipeline_mode = #tpu.pipeline_mode<synchronous>, transform_indices = @transform_3, window_bounds = array<i64: 32, 32>}, {pipeline_mode = #tpu.pipeline_mode<synchronous>, transform_indices = @transform_4, window_bounds = array<i64: 1, 32>}, {transform_indices = @transform_5, window_bounds = array<i64: 512, 32>}]} {
    %c0 = arith.constant 0 : index
    %c0_0 = arith.constant 0 : index
    %0 = vector.load %arg1[%c0, %c0_0] : memref<512x16xf32, #tpu.memory_space<vmem>>, vector<512x16xf32>
    %c0_1 = arith.constant 0 : index
    %c0_2 = arith.constant 0 : index
    %1 = vector.load %arg2[%c0_1, %c0_2] : memref<16x32xf32, #tpu.memory_space<vmem>>, vector<16x32xf32>
    %cst = arith.constant dense<0.000000e+00> : vector<512x32xf32>
    %2 = tpu.matmul %0, %1, %cst {dimension_numbers = #tpu.dot_dimension_numbers<[1], [0], [0], [1], [0, 0, 1, 1], [], []>} : vector<512x16xf32>, vector<16x32xf32>, vector<512x32xf32> -> vector<512x32xf32>
    %c0_3 = arith.constant 0 : index
    %c0_4 = arith.constant 0 : index
    %3 = vector.load %arg3[%c0_3, %c0_4] : memref<1x32xf32, #tpu.memory_space<vmem>>, vector<1x32xf32>
    %4 = vector.broadcast %3 : vector<1x32xf32> to vector<512x32xf32>
    %5 = arith.addf %2, %4 : vector<512x32xf32>
    %cst_5 = arith.constant 0.000000e+00 : f32
    %6 = vector.broadcast %cst_5 : f32 to vector<512x32xf32>
    %7 = arith.maximumf %5, %6 : vector<512x32xf32>
    %c0_6 = arith.constant 0 : index
    %c0_7 = arith.constant 0 : index
    %8 = vector.load %arg4[%c0_6, %c0_7] : memref<32x32xf32, #tpu.memory_space<vmem>>, vector<32x32xf32>
    %cst_8 = arith.constant dense<0.000000e+00> : vector<512x32xf32>
    %9 = tpu.matmul %7, %8, %cst_8 {dimension_numbers = #tpu.dot_dimension_numbers<[1], [0], [0], [1], [0, 0, 1, 1], [], []>} : vector<512x32xf32>, vector<32x32xf32>, vector<512x32xf32> -> vector<512x32xf32>
    %c0_9 = arith.constant 0 : index
    %c0_10 = arith.constant 0 : index
    %10 = vector.load %arg5[%c0_9, %c0_10] : memref<1x32xf32, #tpu.memory_space<vmem>>, vector<1x32xf32>
    %11 = vector.broadcast %10 : vector<1x32xf32> to vector<512x32xf32>
    %12 = arith.addf %9, %11 : vector<512x32xf32>
    %cst_11 = arith.constant 0.000000e+00 : f32
    %13 = vector.broadcast %cst_11 : f32 to vector<512x32xf32>
    %14 = arith.maximumf %12, %13 : vector<512x32xf32>
    %c0_12 = arith.constant 0 : index
    %c0_13 = arith.constant 0 : index
    %15 = vector.load %arg6[%c0_12, %c0_13] : memref<512x32xf32, #tpu.memory_space<vmem>>, vector<512x32xf32>
    tpu.vector_store %arg6[%c0_12, %c0_13], %14 {strides = array<i32>} : memref<512x32xf32, #tpu.memory_space<vmem>>, vector<512x32xf32>,
    return
  }
  func.func @transform_0(%arg0: i32) -> (i32, i32) {
    %c0_i32 = arith.constant 0 : i32
    %c0_i32_0 = arith.constant 0 : i32
    return %arg0, %c0_i32 : i32, i32
  }
  func.func @transform_1(%arg0: i32) -> (i32, i32) {
    %c0_i32 = arith.constant 0 : i32
    %c0_i32_0 = arith.constant 0 : i32
    %c0_i32_1 = arith.constant 0 : i32
    return %c0_i32, %c0_i32_0 : i32, i32
  }
  func.func @transform_2(%arg0: i32) -> (i32, i32) {
    %c0_i32 = arith.constant 0 : i32
    %c0_i32_0 = arith.constant 0 : i32
    %c0_i32_1 = arith.constant 0 : i32
    return %c0_i32, %c0_i32_0 : i32, i32
  }
  func.func @transform_3(%arg0: i32) -> (i32, i32) {
    %c0_i32 = arith.constant 0 : i32
    %c0_i32_0 = arith.constant 0 : i32
    %c0_i32_1 = arith.constant 0 : i32
    return %c0_i32, %c0_i32_0 : i32, i32
  }
  func.func @transform_4(%arg0: i32) -> (i32, i32) {
    %c0_i32 = arith.constant 0 : i32
    %c0_i32_0 = arith.constant 0 : i32
    %c0_i32_1 = arith.constant 0 : i32
    return %c0_i32, %c0_i32_0 : i32, i32
  }
  func.func @transform_5(%arg0: i32) -> (i32, i32) {
    %c0_i32 = arith.constant 0 : i32
    %c0_i32_0 = arith.constant 0 : i32
    return %arg0, %c0_i32 : i32, i32
  }
}

</mosaic_0001>

<llo_original>
// kernel: tpu_custom_call.1
$region0: #{tpu_custom_call.1}
  #allocation0 [shape = 'u32[]', space=smem, size = 0x4, offset = 0x4, fixed_abs, tag = 'smem constant byte address 0x4 - core index']
  #allocation1 [shape = 'u32[144,128]{1,0:T(1,128)}', space=vmem, size = 0x12000, scoped, tag = 'internal scratch']
  %s0 = inlined_call_operand.vmem [shape: f32[1024,16], index: 0, kind: input, shape index: {}]
  %s1 = inlined_call_operand.vmem [shape: f32[16,32], index: 1, kind: input, shape index: {}]
  %s2 = inlined_call_operand.vmem [shape: f32[1,32], index: 2, kind: input, shape index: {}]
  %s3 = inlined_call_operand.vmem [shape: f32[32,32], index: 3, kind: input, shape index: {}]
  %s4 = inlined_call_operand.vmem [shape: f32[1,32], index: 4, kind: input, shape index: {}]
  %s5 = inlined_call_operand.vmem [shape: f32[1024,32], index: 5, kind: output, shape index: {}]
  %s6 = sld [smem:[#allocation0]]
  $region53: #{tpu_custom_call.1} parent=0
    _
  %s8 = ssub.s32 1, %s6
  %s9 = scalar_select 0, %s8, %s6
  loop: start=0, step=1, limit=4
  $region2: #{tpu_custom_call.1} parent=0 // loop_pre_header
    _
  $region3: #{tpu_custom_call.1} parent=0 // loop_header
    %s11 = sphi 0, %s15
    %p12 = scmp.ge.s32.totalorder %s11, 4
    %s21 = sphi 0, %s23
    %s24 = sphi 0, %s21
    %s25 = sphi 0, %s24
    %s41 = sphi 0, %s25
    %s45 = sphi 0, %s45
    %s47 = sphi 0, %s45
    %s48 = sphi 0, %s47
    %s62 = sphi 0, %s48
    %s66 = sphi 0, %s66
    %s68 = sphi 0, %s66
    %s69 = sphi 0, %s68
    %s83 = sphi 0, %s69
    %s87 = sphi 0, %s87
    %s89 = sphi 0, %s87
    %s90 = sphi 0, %s89
    %s104 = sphi 0, %s90
    %s108 = sphi 0, %s108
    %s110 = sphi 0, %s108
    %s111 = sphi 0, %s110
    %s125 = sphi 0, %s111
    %s131 = sphi 0, %s133
    %s134 = sphi 0, %s131
    %s135 = sphi 0, %s134
    %s151 = sphi 0, %s135
  $region4: #{tpu_custom_call.1} parent=0 // loop_header_branch
    %14 = sbr.rel (%p12) target = $region8
  $region5: #{tpu_custom_call.1} parent=0 // loop_body
    %s16 = ssub.s32 %s11, 1
    %s17 = ssub.s32 %s11, 2
    %s18 = sadd.s32 %s11, 1
    %s19 = ssub.s32 %s11, %s18
    %p20 = scmp.eq.s32.totalorder %s19, 0
    %s22 = sadd.s32 %s21, 1
    %s23 = scalar_select %p20, %s21, %s22
    %p26 = pneg %p20
    %p27 = scmp.eq.s32.totalorder %s11, 1
    %p28 = por %p26, %p27
    %p29 = scmp.ne.s32.totalorder %s21, %s24
    %p30 = scmp.eq.s32.totalorder %s11, 0
    %p31 = por %p29, %p30
    %p32 = scmp.ne.s32.totalorder %s21, %s24
    %p33 = scmp.eq.s32.totalorder %s16, 1
    %p34 = por %p32, %p33
    %p35 = scmp.ne.s32.totalorder %s24, %s25
    %p36 = scmp.eq.s32.totalorder %s16, 0
    %p37 = por %p35, %p36
    %p38 = scmp.ne.s32.totalorder %s24, %s25
    %p39 = scmp.eq.s32.totalorder %s17, 1
    %p40 = por %p38, %p39
    %p42 = scmp.ne.s32.totalorder %s25, %s41
    %p43 = scmp.eq.s32.totalorder %s17, 0
    %p44 = por %p42, %p43
    %s46 = sadd.s32 %s45, 1
    %p49 = scmp.eq.s32.totalorder %s11, 1
    %p50 = scmp.ne.s32.totalorder %s45, %s47
    %p51 = scmp.eq.s32.totalorder %s11, 0
    %p52 = por %p50, %p51
    %p53 = scmp.ne.s32.totalorder %s45, %s47
    %p54 = scmp.eq.s32.totalorder %s16, 1
    %p55 = por %p53, %p54
    %p56 = scmp.ne.s32.totalorder %s47, %s48
    %p57 = scmp.eq.s32.totalorder %s16, 0
    %p58 = por %p56, %p57
    %p59 = scmp.ne.s32.totalorder %s47, %s48
    %p60 = scmp.eq.s32.totalorder %s17, 1
    %p61 = por %p59, %p60
    %p63 = scmp.ne.s32.totalorder %s48, %s62
    %p64 = scmp.eq.s32.totalorder %s17, 0
    %p65 = por %p63, %p64
    %s67 = sadd.s32 %s66, 1
    %p70 = scmp.eq.s32.totalorder %s11, 1
    %p71 = scmp.ne.s32.totalorder %s66, %s68
    %p72 = scmp.eq.s32.totalorder %s11, 0
    %p73 = por %p71, %p72
    %p74 = scmp.ne.s32.totalorder %s66, %s68
    %p75 = scmp.eq.s32.totalorder %s16, 1
    %p76 = por %p74, %p75
    %p77 = scmp.ne.s32.totalorder %s68, %s69
    %p78 = scmp.eq.s32.totalorder %s16, 0
    %p79 = por %p77, %p78
    %p80 = scmp.ne.s32.totalorder %s68, %s69
    %p81 = scmp.eq.s32.totalorder %s17, 1
    %p82 = por %p80, %p81
    %p84 = scmp.ne.s32.totalorder %s69, %s83
    %p85 = scmp.eq.s32.totalorder %s17, 0
    %p86 = por %p84, %p85
    %s88 = sadd.s32 %s87, 1
    %p91 = scmp.eq.s32.totalorder %s11, 1
    %p92 = scmp.ne.s32.totalorder %s87, %s89
    %p93 = scmp.eq.s32.totalorder %s11, 0
    %p94 = por %p92, %p93
    %p95 = scmp.ne.s32.totalorder %s87, %s89
    %p96 = scmp.eq.s32.totalorder %s16, 1
    %p97 = por %p95, %p96
    %p98 = scmp.ne.s32.totalorder %s89, %s90
    %p99 = scmp.eq.s32.totalorder %s16, 0
    %p100 = por %p98, %p99
    %p101 = scmp.ne.s32.totalorder %s89, %s90
    %p102 = scmp.eq.s32.totalorder %s17, 1
    %p103 = por %p101, %p102
    %p105 = scmp.ne.s32.totalorder %s90, %s104
    %p106 = scmp.eq.s32.totalorder %s17, 0
    %p107 = por %p105, %p106
    %s109 = sadd.s32 %s108, 1
    %p112 = scmp.eq.s32.totalorder %s11, 1
    %p113 = scmp.ne.s32.totalorder %s108, %s110
    %p114 = scmp.eq.s32.totalorder %s11, 0
    %p115 = por %p113, %p114
    %p116 = scmp.ne.s32.totalorder %s108, %s110
    %p117 = scmp.eq.s32.totalorder %s16, 1
    %p118 = por %p116, %p117
    %p119 = scmp.ne.s32.totalorder %s110, %s111
    %p120 = scmp.eq.s32.totalorder %s16, 0
    %p121 = por %p119, %p120
    %p122 = scmp.ne.s32.totalorder %s110, %s111
    %p123 = scmp.eq.s32.totalorder %s17, 1
    %p124 = por %p122, %p123
    %p126 = scmp.ne.s32.totalorder %s111, %s125
    %p127 = scmp.eq.s32.totalorder %s17, 0
    %p128 = por %p126, %p127
    %s129 = ssub.s32 %s11, %s18
    %p130 = scmp.eq.s32.totalorder %s129, 0
    %s132 = sadd.s32 %s131, 1
    %s133 = scalar_select %p130, %s131, %s132
    %p136 = pneg %p130
    %p137 = scmp.eq.s32.totalorder %s11, 1
    %p138 = por %p136, %p137
    %p139 = scmp.ne.s32.totalorder %s131, %s134
    %p140 = scmp.eq.s32.totalorder %s11, 0
    %p141 = por %p139, %p140
    %p142 = scmp.ne.s32.totalorder %s131, %s134
    %p143 = scmp.eq.s32.totalorder %s16, 1
    %p144 = por %p142, %p143
    %p145 = scmp.ne.s32.totalorder %s134, %s135
    %p146 = scmp.eq.s32.totalorder %s16, 0
    %p147 = por %p145, %p146
    %p148 = scmp.ne.s32.totalorder %s134, %s135
    %p149 = scmp.eq.s32.totalorder %s17, 1
    %p150 = por %p148, %p149
    %p152 = scmp.ne.s32.totalorder %s135, %s151
    %p153 = scmp.eq.s32.totalorder %s17, 0
    %p154 = por %p152, %p153
    %p155 = scmp.le.s32.totalorder 1, %s11
    %p156 = scmp.lt.s32.totalorder %s11, 3
    %p157 = pnand %p155, %p156
    %p158 = pneg %p157
    // Predicated region
    $region9: #{tpu_custom_call.1} parent=5 // pred_check
      _
    $region10: #{tpu_custom_call.1} parent=5 // pred_check_branch
      %160 = sbr.rel (%p157) target = $region12
    $region11: #{tpu_custom_call.1} parent=5 // pred_region
      %s161 = ssub.s32 %s11, 1
      // Predicated region
      $region13: #{tpu_custom_call.1} parent=11 // pred_check
        %p162 = pneg %p58
      $region14: #{tpu_custom_call.1} parent=11 // pred_check_branch
        %164 = sbr.rel (%p162) target = $region16
      $region15: #{tpu_custom_call.1} parent=11 // pred_region
        _
      $region16: #{tpu_custom_call.1} parent=11 // pred_fallthru
        _
      // Predicated region
      $region17: #{tpu_custom_call.1} parent=11 // pred_check
        %p165 = pneg %p79
      $region18: #{tpu_custom_call.1} parent=11 // pred_check_branch
        %167 = sbr.rel (%p165) target = $region20
      $region19: #{tpu_custom_call.1} parent=11 // pred_region
        _
      $region20: #{tpu_custom_call.1} parent=11 // pred_fallthru
        _
      // Predicated region
      $region21: #{tpu_custom_call.1} parent=11 // pred_check
        %p168 = pneg %p100
      $region22: #{tpu_custom_call.1} parent=11 // pred_check_branch
        %170 = sbr.rel (%p168) target = $region24
      $region23: #{tpu_custom_call.1} parent=11 // pred_region
        _
      $region24: #{tpu_custom_call.1} parent=11 // pred_fallthru
        _
      // Predicated region
      $region25: #{tpu_custom_call.1} parent=11 // pred_check
        %p171 = pneg %p121
      $region26: #{tpu_custom_call.1} parent=11 // pred_check_branch
        %173 = sbr.rel (%p171) target = $region28
      $region27: #{tpu_custom_call.1} parent=11 // pred_region
        _
      $region28: #{tpu_custom_call.1} parent=11 // pred_fallthru
        _
    $region12: #{tpu_custom_call.1} parent=5 // pred_fallthru
      _
    %p174 = scmp.lt.s32.totalorder %s11, 2
    // Predicated region
    $region29: #{tpu_custom_call.1} parent=5 // pred_check
      %p175 = pneg %p174
    $region30: #{tpu_custom_call.1} parent=5 // pred_check_branch
      %177 = sbr.rel (%p175) target = $region32
    $region31: #{tpu_custom_call.1} parent=5 // pred_region
      // Predicated region
      $region33: #{tpu_custom_call.1} parent=31 // pred_check
        %p178 = pneg %p31
      $region34: #{tpu_custom_call.1} parent=31 // pred_check_branch
        %180 = sbr.rel (%p178) target = $region36
      $region35: #{tpu_custom_call.1} parent=31 // pred_region
        %s181 = smul.u32 64, %s11
        %p182 = scmp.lt.s32.totalorder %s181, 127
        %s183 = scalar_select %p182, %s181, 127
        %s184 = smul.addr %s183, 8
        %s185 = scalar_lea.vmem %s0, %s184
        %s186 = smul.u32 64, %s11
      $region36: #{tpu_custom_call.1} parent=31 // pred_fallthru
        _
    $region32: #{tpu_custom_call.1} parent=5 // pred_fallthru
      _
    %p187 = scmp.le.s32.totalorder 1, %s11
    %p188 = scmp.lt.s32.totalorder %s11, 3
    %p189 = pnand %p187, %p188
    %p190 = pneg %p189
    // Predicated region
    $region37: #{tpu_custom_call.1} parent=5 // pred_check
      _
    $region38: #{tpu_custom_call.1} parent=5 // pred_check_branch
      %192 = sbr.rel (%p189) target = $region40
    $region39: #{tpu_custom_call.1} parent=5 // pred_region
      %s193 = ssub.s32 %s11, 1
      %s194 = smul.u32 64, %s16
      %p195 = scmp.lt.s32.totalorder %s194, 127
      %s196 = scalar_select %p195, %s194, 127
      %s197 = smul.addr %s196, 8
      %s198 = scalar_lea.vmem %s0, %s197
      %p199 = pneg %p37
      %p200 = pneg %p34
      %p201 = pneg %p58
      %p202 = pneg %p55
      %p203 = pneg %p79
      %p204 = pneg %p76
      %p205 = pneg %p100
      %p206 = pneg %p97
      %p207 = pneg %p121
      %p208 = pneg %p118
      %p209 = pneg %p147
      %p210 = pneg %p144
      %s211 = smul.u32 64, %s16
      %p212 = scmp.lt.s32.totalorder %s211, 127
      %s213 = scalar_select %p212, %s211, 127
      %s214 = smul.addr %s213, 8
      %s215 = scalar_lea.vmem %s5, %s214
      %s216 = smul.u32 64, %s16
      %p217 = scmp.lt.s32.totalorder %s216, 127
      %s218 = scalar_select %p217, %s216, 127
      %s219 = smul.addr %s218, 8
      %s220 = scalar_lea.vmem %s0, %s219
      %s221 = smul.u32 64, %s16
      %s222 = smul.u32 64, %s16
      %p223 = scmp.lt.s32.totalorder %s222, 127
      %s224 = scalar_select %p223, %s222, 127
      %s225 = smul.addr %s224, 8
      %s226 = scalar_lea.vmem %s5, %s225
      %s227 = smul.u32 64, %s16
      %v228 = vld [vmem:[%s220] sm:$0xff]
      %v229 = vld [vmem:[%s220 + $0x8] sm:$0xff]
      %v230 = vld [vmem:[%s220 + $0x10] sm:$0xff]
      %v231 = vld [vmem:[%s220 + $0x18] sm:$0xff]
      %v232 = vld [vmem:[%s220 + $0x20] sm:$0xff]
      %v233 = vld [vmem:[%s220 + $0x28] sm:$0xff]
      %v234 = vld [vmem:[%s220 + $0x30] sm:$0xff]
      %v235 = vld [vmem:[%s220 + $0x38] sm:$0xff]
      %v236 = vld [vmem:[%s220 + $0x40] sm:$0xff]
      %v237 = vld [vmem:[%s220 + $0x48] sm:$0xff]
      %v238 = vld [vmem:[%s220 + $0x50] sm:$0xff]
      %v239 = vld [vmem:[%s220 + $0x58] sm:$0xff]
      %v240 = vld [vmem:[%s220 + $0x60] sm:$0xff]
      %v241 = vld [vmem:[%s220 + $0x68] sm:$0xff]
      %v242 = vld [vmem:[%s220 + $0x70] sm:$0xff]
      %v243 = vld [vmem:[%s220 + $0x78] sm:$0xff]
      %v244 = vld [vmem:[%s220 + $0x80] sm:$0xff]
      %v245 = vld [vmem:[%s220 + $0x88] sm:$0xff]
      %v246 = vld [vmem:[%s220 + $0x90] sm:$0xff]
      %v247 = vld [vmem:[%s220 + $0x98] sm:$0xff]
      %v248 = vld [vmem:[%s220 + $0xa0] sm:$0xff]
      %v249 = vld [vmem:[%s220 + $0xa8] sm:$0xff]
      %v250 = vld [vmem:[%s220 + $0xb0] sm:$0xff]
      %v251 = vld [vmem:[%s220 + $0xb8] sm:$0xff]
      %v252 = vld [vmem:[%s220 + $0xc0] sm:$0xff]
      %v253 = vld [vmem:[%s220 + $0xc8] sm:$0xff]
      %v254 = vld [vmem:[%s220 + $0xd0] sm:$0xff]
      %v255 = vld [vmem:[%s220 + $0xd8] sm:$0xff]
      %v256 = vld [vmem:[%s220 + $0xe0] sm:$0xff]
      %v257 = vld [vmem:[%s220 + $0xe8] sm:$0xff]
      %v258 = vld [vmem:[%s220 + $0xf0] sm:$0xff]
      %v259 = vld [vmem:[%s220 + $0xf8] sm:$0xff]
      %v260 = vld [vmem:[%s220 + $0x100] sm:$0xff]
      %v261 = vld [vmem:[%s220 + $0x108] sm:$0xff]
      %v262 = vld [vmem:[%s220 + $0x110] sm:$0xff]
      %v263 = vld [vmem:[%s220 + $0x118] sm:$0xff]
      %v264 = vld [vmem:[%s220 + $0x120] sm:$0xff]
      %v265 = vld [vmem:[%s220 + $0x128] sm:$0xff]
      %v266 = vld [vmem:[%s220 + $0x130] sm:$0xff]
      %v267 = vld [vmem:[%s220 + $0x138] sm:$0xff]
      %v268 = vld [vmem:[%s220 + $0x140] sm:$0xff]
      %v269 = vld [vmem:[%s220 + $0x148] sm:$0xff]
      %v270 = vld [vmem:[%s220 + $0x150] sm:$0xff]
      %v271 = vld [vmem:[%s220 + $0x158] sm:$0xff]
      %v272 = vld [vmem:[%s220 + $0x160] sm:$0xff]
      %v273 = vld [vmem:[%s220 + $0x168] sm:$0xff]
      %v274 = vld [vmem:[%s220 + $0x170] sm:$0xff]
      %v275 = vld [vmem:[%s220 + $0x178] sm:$0xff]
      %v276 = vld [vmem:[%s220 + $0x180] sm:$0xff]
      %v277 = vld [vmem:[%s220 + $0x188] sm:$0xff]
      %v278 = vld [vmem:[%s220 + $0x190] sm:$0xff]
      %v279 = vld [vmem:[%s220 + $0x198] sm:$0xff]
      %v280 = vld [vmem:[%s220 + $0x1a0] sm:$0xff]
      %v281 = vld [vmem:[%s220 + $0x1a8] sm:$0xff]
      %v282 = vld [vmem:[%s220 + $0x1b0] sm:$0xff]
      %v283 = vld [vmem:[%s220 + $0x1b8] sm:$0xff]
      %v284 = vld [vmem:[%s220 + $0x1c0] sm:$0xff]
      %v285 = vld [vmem:[%s220 + $0x1c8] sm:$0xff]
      %v286 = vld [vmem:[%s220 + $0x1d0] sm:$0xff]
      %v287 = vld [vmem:[%s220 + $0x1d8] sm:$0xff]
      %v288 = vld [vmem:[%s220 + $0x1e0] sm:$0xff]
      %v289 = vld [vmem:[%s220 + $0x1e8] sm:$0xff]
      %v290 = vld [vmem:[%s220 + $0x1f0] sm:$0xff]
      %v291 = vld [vmem:[%s220 + $0x1f8] sm:$0xff]
      %v292 = vld [vmem:[%s1] sm:$0xff]
      %v293 = vld [vmem:[%s1 + $0x8] sm:$0xff]
      %v294 = vld [vmem:[%s2] sm:$0x1]
      %v296 = vlaneseq
      %v297 = vshrl.u32 %v296, 7
      %v298 = vsub.s32 0, %v297
      %v299 = vrot.slane %v294, %v298
      %vm301 = vcmask 130048
      %v303 = vsel %vm301, %v228, 0
      %v306 = vsel %vm301, %v229, 0
      %v309 = vsel %vm301, %v230, 0
      %v312 = vsel %vm301, %v231, 0
      %v315 = vsel %vm301, %v232, 0
      %v318 = vsel %vm301, %v233, 0
      %v321 = vsel %vm301, %v234, 0
      %v324 = vsel %vm301, %v235, 0
      %v327 = vsel %vm301, %v236, 0
      %v330 = vsel %vm301, %v237, 0
      %v333 = vsel %vm301, %v238, 0
      %v336 = vsel %vm301, %v239, 0
      %v339 = vsel %vm301, %v240, 0
      %v342 = vsel %vm301, %v241, 0
      %v345 = vsel %vm301, %v242, 0
      %v348 = vsel %vm301, %v243, 0
      %v351 = vsel %vm301, %v244, 0
      %v354 = vsel %vm301, %v245, 0
      %v357 = vsel %vm301, %v246, 0
      %v360 = vsel %vm301, %v247, 0
      %v363 = vsel %vm301, %v248, 0
      %v366 = vsel %vm301, %v249, 0
      %v369 = vsel %vm301, %v250, 0
      %v372 = vsel %vm301, %v251, 0
      %v375 = vsel %vm301, %v252, 0
      %v378 = vsel %vm301, %v253, 0
      %v381 = vsel %vm301, %v254, 0
      %v384 = vsel %vm301, %v255, 0
      %v387 = vsel %vm301, %v256, 0
      %v390 = vsel %vm301, %v257, 0
      %v393 = vsel %vm301, %v258, 0
      %v396 = vsel %vm301, %v259, 0
      %v399 = vsel %vm301, %v260, 0
      %v402 = vsel %vm301, %v261, 0
      %v405 = vsel %vm301, %v262, 0
      %v408 = vsel %vm301, %v263, 0
      %v411 = vsel %vm301, %v264, 0
      %v414 = vsel %vm301, %v265, 0
      %v417 = vsel %vm301, %v266, 0
      %v420 = vsel %vm301, %v267, 0
      %v423 = vsel %vm301, %v268, 0
      %v426 = vsel %vm301, %v269, 0
      %v429 = vsel %vm301, %v270, 0
      %v432 = vsel %vm301, %v271, 0
      %v435 = vsel %vm301, %v272, 0
      %v438 = vsel %vm301, %v273, 0
      %v441 = vsel %vm301, %v274, 0
      %v444 = vsel %vm301, %v275, 0
      %v447 = vsel %vm301, %v276, 0
      %v450 = vsel %vm301, %v277, 0
      %v453 = vsel %vm301, %v278, 0
      %v456 = vsel %vm301, %v279, 0
      %v459 = vsel %vm301, %v280, 0
      %v462 = vsel %vm301, %v281, 0
      %v465 = vsel %vm301, %v282, 0
      %v468 = vsel %vm301, %v283, 0
      %v471 = vsel %vm301, %v284, 0
      %v474 = vsel %vm301, %v285, 0
      %v477 = vsel %vm301, %v286, 0
      %v480 = vsel %vm301, %v287, 0
      %v483 = vsel %vm301, %v288, 0
      %v486 = vsel %vm301, %v289, 0
      %v489 = vsel %vm301, %v290, 0
      %v492 = vsel %vm301, %v291, 0
      %494 = vmatprep.subr.mxu0 0.0
      %495 = vmatpush1.msra.mxu0 %v292
      %496 = vmatprep.subr.mxu0 0.0
      %497 = vmatpush1.msra.mxu0 %v293
      %498 = vmatprep.subr.mxu0 0.0
      %499 = vmatpush1.msra.mxu0 0.0
      %500 = vmatprep.subr.mxu0 0.0
      %501 = vmatpush1.msra.mxu0 0.0
      %502 = vmatprep.subr.mxu0 0.0
      %503 = vmatpush1.msra.mxu0 0.0
      %504 = vmatprep.subr.mxu0 0.0
      %505 = vmatpush1.msra.mxu0 0.0
      %506 = vmatprep.subr.mxu0 0.0
      %507 = vmatpush1.msra.mxu0 0.0
      %508 = vmatprep.subr.mxu0 0.0
      %509 = vmatpush1.msra.mxu0 0.0
      %510 = vmatprep.subr.mxu0 0.0
      %511 = vmatpush1.msra.mxu0 0.0
      %512 = vmatprep.subr.mxu0 0.0
      %513 = vmatpush1.msra.mxu0 0.0
      %514 = vmatprep.subr.mxu0 0.0
      %515 = vmatpush1.msra.mxu0 0.0
      %516 = vmatprep.subr.mxu0 0.0
      %517 = vmatpush1.msra.mxu0 0.0
      %518 = vmatprep.subr.mxu0 0.0
      %519 = vmatpush1.msra.mxu0 0.0
      %520 = vmatprep.subr.mxu0 0.0
      %521 = vmatpush1.msra.mxu0 0.0
      %522 = vmatprep.subr.mxu0 0.0
      %523 = vmatpush1.msra.mxu0 0.0
      %524 = vmatprep.subr.mxu0 0.0
      %525 = vmatpush1.msra.mxu0 0.0
      %526 = vmatprep.subr.mxu0 0.0
      %527 = vmatpush1.msra.mxu0 0.0
      %528 = vmatprep.subr.mxu0 0.0
      %529 = vmatpush1.msra.mxu0 0.0
      %530 = vmatprep.subr.mxu0 0.0
      %531 = vmatpush1.msra.mxu0 0.0
      %532 = vmatprep.subr.mxu0 0.0
      %533 = vmatpush1.msra.mxu0 0.0
      %534 = vmatprep.subr.mxu0 0.0
      %535 = vmatpush1.msra.mxu0 0.0
      %536 = vmatprep.subr.mxu0 0.0
      %537 = vmatpush1.msra.mxu0 0.0
      %538 = vmatprep.subr.mxu0 0.0
      %539 = vmatpush1.msra.mxu0 0.0
      %540 = vmatprep.subr.mxu0 0.0
      %541 = vmatpush1.msra.mxu0 0.0
      %542 = vmatprep.subr.mxu0 0.0
      %543 = vmatpush1.msra.mxu0 0.0
      %544 = vmatprep.subr.mxu0 0.0
      %545 = vmatpush1.msra.mxu0 0.0
      %546 = vmatprep.subr.mxu0 0.0
      %547 = vmatpush1.msra.mxu0 0.0
      %548 = vmatprep.subr.mxu0 0.0
      %549 = vmatpush1.msra.mxu0 0.0
      %550 = vmatprep.subr.mxu0 0.0
      %551 = vmatpush1.msra.mxu0 0.0
      %552 = vmatprep.subr.mxu0 0.0
      %553 = vmatpush1.msra.mxu0 0.0
      %554 = vmatprep.subr.mxu0 0.0
      %555 = vmatpush1.msra.mxu0 0.0
      %556 = vmatprep.subr.mxu0 0.0
      %557 = vmatpush1.msra.mxu0 0.0
      %558 = vmatprep.mubr.f32.mxu0 0.0
      %559 = vmatmul.mubr.f32.gmra.mrb[0].mxu0 %v303
      %v560 = vpop.f32.mrb[0].mxu0
      %v561 = vadd.f32 %v299, %v560
      %v562 = vpop.f32.mrb[0].mxu0
      %563 = vmatprep.mubr.f32.mxu0 0.0
      %564 = vmatmul.mubr.f32.gmra.mrb[0].mxu0 %v306
      %v565 = vpop.f32.mrb[0].mxu0
      %v566 = vadd.f32 %v299, %v565
      %v567 = vpop.f32.mrb[0].mxu0
      %568 = vmatprep.mubr.f32.mxu0 0.0
      %569 = vmatmul.mubr.f32.gmra.mrb[0].mxu0 %v309
      %v570 = vpop.f32.mrb[0].mxu0
      %v571 = vadd.f32 %v299, %v570
      %v572 = vpop.f32.mrb[0].mxu0
      %573 = vmatprep.mubr.f32.mxu0 0.0
      %574 = vmatmul.mubr.f32.gmra.mrb[0].mxu0 %v312
      %v575 = vpop.f32.mrb[0].mxu0
      %v576 = vadd.f32 %v299, %v575
      %v577 = vpop.f32.mrb[0].mxu0
      %578 = vmatprep.mubr.f32.mxu0 0.0
      %579 = vmatmul.mubr.f32.gmra.mrb[0].mxu0 %v315
      %v580 = vpop.f32.mrb[0].mxu0
      %v581 = vadd.f32 %v299, %v580
      %v582 = vpop.f32.mrb[0].mxu0
      %583 = vmatprep.mubr.f32.mxu0 0.0
      %584 = vmatmul.mubr.f32.gmra.mrb[0].mxu0 %v318
      %v585 = vpop.f32.mrb[0].mxu0
      %v586 = vadd.f32 %v299, %v585
      %v587 = vpop.f32.mrb[0].mxu0
      %588 = vmatprep.mubr.f32.mxu0 0.0
      %589 = vmatmul.mubr.f32.gmra.mrb[0].mxu0 %v321
      %v590 = vpop.f32.mrb[0].mxu0
      %v591 = vadd.f32 %v299, %v590
      %v592 = vpop.f32.mrb[0].mxu0
      %593 = vmatprep.mubr.f32.mxu0 0.0
      %594 = vmatmul.mubr.f32.gmra.mrb[0].mxu0 %v324
      %v595 = vpop.f32.mrb[0].mxu0
      %v596 = vadd.f32 %v299, %v595
      %v597 = vpop.f32.mrb[0].mxu0
      %598 = vmatprep.mubr.f32.mxu0 0.0
      %599 = vmatmul.mubr.f32.gmra.mrb[0].mxu0 %v327
      %v600 = vpop.f32.mrb[0].mxu0
      %v601 = vadd.f32 %v299, %v600
      %v602 = vpop.f32.mrb[0].mxu0
      %603 = vmatprep.mubr.f32.mxu0 0.0
      %604 = vmatmul.mubr.f32.gmra.mrb[0].mxu0 %v330
      %v605 = vpop.f32.mrb[0].mxu0
      %v606 = vadd.f32 %v299, %v605
      %v607 = vpop.f32.mrb[0].mxu0
      %608 = vmatprep.mubr.f32.mxu0 0.0
      %609 = vmatmul.mubr.f32.gmra.mrb[0].mxu0 %v333
      %v610 = vpop.f32.mrb[0].mxu0
      %v611 = vadd.f32 %v299, %v610
      %v612 = vpop.f32.mrb[0].mxu0
      %613 = vmatprep.mubr.f32.mxu0 0.0
      %614 = vmatmul.mubr.f32.gmra.mrb[0].mxu0 %v336
      %v615 = vpop.f32.mrb[0].mxu0
      %v616 = vadd.f32 %v299, %v615
      %v617 = vpop.f32.mrb[0].mxu0
      %618 = vmatprep.mubr.f32.mxu0 0.0
      %619 = vmatmul.mubr.f32.gmra.mrb[0].mxu0 %v339
      %v620 = vpop.f32.mrb[0].mxu0
      %v621 = vadd.f32 %v299, %v620
      %v622 = vpop.f32.mrb[0].mxu0
      %623 = vmatprep.mubr.f32.mxu0 0.0
      %624 = vmatmul.mubr.f32.gmra.mrb[0].mxu0 %v342
      %v625 = vpop.f32.mrb[0].mxu0
      %v626 = vadd.f32 %v299, %v625
      %v627 = vpop.f32.mrb[0].mxu0
      %628 = vmatprep.mubr.f32.mxu0 0.0
      %629 = vmatmul.mubr.f32.gmra.mrb[0].mxu0 %v345
      %v630 = vpop.f32.mrb[0].mxu0
      %v631 = vadd.f32 %v299, %v630
      %v632 = vpop.f32.mrb[0].mxu0
      %633 = vmatprep.mubr.f32.mxu0 0.0
      %634 = vmatmul.mubr.f32.gmra.mrb[0].mxu0 %v348
      %v635 = vpop.f32.mrb[0].mxu0
      %v636 = vadd.f32 %v299, %v635
      %v637 = vpop.f32.mrb[0].mxu0
      %638 = vmatprep.mubr.f32.mxu0 0.0
      %639 = vmatmul.mubr.f32.gmra.mrb[0].mxu0 %v351
      %v640 = vpop.f32.mrb[0].mxu0
      %v641 = vadd.f32 %v299, %v640
      %v642 = vpop.f32.mrb[0].mxu0
      %643 = vmatprep.mubr.f32.mxu0 0.0
      %644 = vmatmul.mubr.f32.gmra.mrb[0].mxu0 %v354
      %v645 = vpop.f32.mrb[0].mxu0
      %v646 = vadd.f32 %v299, %v645
      %v647 = vpop.f32.mrb[0].mxu0
      %648 = vmatprep.mubr.f32.mxu0 0.0
      %649 = vmatmul.mubr.f32.gmra.mrb[0].mxu0 %v357
      %v650 = vpop.f32.mrb[0].mxu0
      %v651 = vadd.f32 %v299, %v650
      %v652 = vpop.f32.mrb[0].mxu0
      %653 = vmatprep.mubr.f32.mxu0 0.0
      %654 = vmatmul.mubr.f32.gmra.mrb[0].mxu0 %v360
      %v655 = vpop.f32.mrb[0].mxu0
      %v656 = vadd.f32 %v299, %v655
      %v657 = vpop.f32.mrb[0].mxu0
      %658 = vmatprep.mubr.f32.mxu0 0.0
      %659 = vmatmul.mubr.f32.gmra.mrb[0].mxu0 %v363
      %v660 = vpop.f32.mrb[0].mxu0
      %v661 = vadd.f32 %v299, %v660
      %v662 = vpop.f32.mrb[0].mxu0
      %663 = vmatprep.mubr.f32.mxu0 0.0
      %664 = vmatmul.mubr.f32.gmra.mrb[0].mxu0 %v366
      %v665 = vpop.f32.mrb[0].mxu0
      %v666 = vadd.f32 %v299, %v665
      %v667 = vpop.f32.mrb[0].mxu0
      %668 = vmatprep.mubr.f32.mxu0 0.0
      %669 = vmatmul.mubr.f32.gmra.mrb[0].mxu0 %v369
      %v670 = vpop.f32.mrb[0].mxu0
      %v671 = vadd.f32 %v299, %v670
      %v672 = vpop.f32.mrb[0].mxu0
      %673 = vmatprep.mubr.f32.mxu0 0.0
      %674 = vmatmul.mubr.f32.gmra.mrb[0].mxu0 %v372
      %v675 = vpop.f32.mrb[0].mxu0
      %v676 = vadd.f32 %v299, %v675
      %v677 = vpop.f32.mrb[0].mxu0
      %678 = vmatprep.mubr.f32.mxu0 0.0
      %679 = vmatmul.mubr.f32.gmra.mrb[0].mxu0 %v375
      %v680 = vpop.f32.mrb[0].mxu0
      %v681 = vadd.f32 %v299, %v680
      %v682 = vpop.f32.mrb[0].mxu0
      %683 = vmatprep.mubr.f32.mxu0 0.0
      %684 = vmatmul.mubr.f32.gmra.mrb[0].mxu0 %v378
      %v685 = vpop.f32.mrb[0].mxu0
      %v686 = vadd.f32 %v299, %v685
      %v687 = vpop.f32.mrb[0].mxu0
      %688 = vmatprep.mubr.f32.mxu0 0.0
      %689 = vmatmul.mubr.f32.gmra.mrb[0].mxu0 %v381
      %v690 = vpop.f32.mrb[0].mxu0
      %v691 = vadd.f32 %v299, %v690
      %v692 = vpop.f32.mrb[0].mxu0
      %693 = vmatprep.mubr.f32.mxu0 0.0
      %694 = vmatmul.mubr.f32.gmra.mrb[0].mxu0 %v384
      %v695 = vpop.f32.mrb[0].mxu0
      %v696 = vadd.f32 %v299, %v695
      %v697 = vpop.f32.mrb[0].mxu0
      %698 = vmatprep.mubr.f32.mxu0 0.0
      %699 = vmatmul.mubr.f32.gmra.mrb[0].mxu0 %v387
      %v700 = vpop.f32.mrb[0].mxu0
      %v701 = vadd.f32 %v299, %v700
      %v702 = vpop.f32.mrb[0].mxu0
      %703 = vmatprep.mubr.f32.mxu0 0.0
      %704 = vmatmul.mubr.f32.gmra.mrb[0].mxu0 %v390
      %v705 = vpop.f32.mrb[0].mxu0
      %v706 = vadd.f32 %v299, %v705
      %v707 = vpop.f32.mrb[0].mxu0
      %708 = vmatprep.mubr.f32.mxu0 0.0
      %709 = vmatmul.mubr.f32.gmra.mrb[0].mxu0 %v393
      %v710 = vpop.f32.mrb[0].mxu0
      %v711 = vadd.f32 %v299, %v710
      %v712 = vpop.f32.mrb[0].mxu0
      %713 = vmatprep.mubr.f32.mxu0 0.0
      %714 = vmatmul.mubr.f32.gmra.mrb[0].mxu0 %v396
      %v715 = vpop.f32.mrb[0].mxu0
      %v716 = vadd.f32 %v299, %v715
      %v717 = vpop.f32.mrb[0].mxu0
      %718 = vmatprep.mubr.f32.mxu0 0.0
      %719 = vmatmul.mubr.f32.gmra.mrb[0].mxu0 %v399
      %v720 = vpop.f32.mrb[0].mxu0
      %v721 = vadd.f32 %v299, %v720
      %v722 = vpop.f32.mrb[0].mxu0
      %723 = vmatprep.mubr.f32.mxu0 0.0
      %724 = vmatmul.mubr.f32.gmra.mrb[0].mxu0 %v402
      %v725 = vpop.f32.mrb[0].mxu0
      %v726 = vadd.f32 %v299, %v725
      %v727 = vpop.f32.mrb[0].mxu0
      %728 = vmatprep.mubr.f32.mxu0 0.0
      %729 = vmatmul.mubr.f32.gmra.mrb[0].mxu0 %v405
      %v730 = vpop.f32.mrb[0].mxu0
      %v731 = vadd.f32 %v299, %v730
      %v732 = vpop.f32.mrb[0].mxu0
      %733 = vmatprep.mubr.f32.mxu0 0.0
      %734 = vmatmul.mubr.f32.gmra.mrb[0].mxu0 %v408
      %v735 = vpop.f32.mrb[0].mxu0
      %v736 = vadd.f32 %v299, %v735
      %v737 = vpop.f32.mrb[0].mxu0
      %738 = vmatprep.mubr.f32.mxu0 0.0
      %739 = vmatmul.mubr.f32.gmra.mrb[0].mxu0 %v411
      %v740 = vpop.f32.mrb[0].mxu0
      %v741 = vadd.f32 %v299, %v740
      %v742 = vpop.f32.mrb[0].mxu0
      %743 = vmatprep.mubr.f32.mxu0 0.0
      %744 = vmatmul.mubr.f32.gmra.mrb[0].mxu0 %v414
      %v745 = vpop.f32.mrb[0].mxu0
      %v746 = vadd.f32 %v299, %v745
      %v747 = vpop.f32.mrb[0].mxu0
      %748 = vmatprep.mubr.f32.mxu0 0.0
      %749 = vmatmul.mubr.f32.gmra.mrb[0].mxu0 %v417
      %v750 = vpop.f32.mrb[0].mxu0
      %v751 = vadd.f32 %v299, %v750
      %v752 = vpop.f32.mrb[0].mxu0
      %753 = vmatprep.mubr.f32.mxu0 0.0
      %754 = vmatmul.mubr.f32.gmra.mrb[0].mxu0 %v420
      %v755 = vpop.f32.mrb[0].mxu0
      %v756 = vadd.f32 %v299, %v755
      %v757 = vpop.f32.mrb[0].mxu0
      %758 = vmatprep.mubr.f32.mxu0 0.0
      %759 = vmatmul.mubr.f32.gmra.mrb[0].mxu0 %v423
      %v760 = vpop.f32.mrb[0].mxu0
      %v761 = vadd.f32 %v299, %v760
      %v762 = vpop.f32.mrb[0].mxu0
      %763 = vmatprep.mubr.f32.mxu0 0.0
      %764 = vmatmul.mubr.f32.gmra.mrb[0].mxu0 %v426
      %v765 = vpop.f32.mrb[0].mxu0
      %v766 = vadd.f32 %v299, %v765
      %v767 = vpop.f32.mrb[0].mxu0
      %768 = vmatprep.mubr.f32.mxu0 0.0
      %769 = vmatmul.mubr.f32.gmra.mrb[0].mxu0 %v429
      %v770 = vpop.f32.mrb[0].mxu0
      %v771 = vadd.f32 %v299, %v770
      %v772 = vpop.f32.mrb[0].mxu0
      %773 = vmatprep.mubr.f32.mxu0 0.0
      %774 = vmatmul.mubr.f32.gmra.mrb[0].mxu0 %v432
      %v775 = vpop.f32.mrb[0].mxu0
      %v776 = vadd.f32 %v299, %v775
      %v777 = vpop.f32.mrb[0].mxu0
      %778 = vmatprep.mubr.f32.mxu0 0.0
      %779 = vmatmul.mubr.f32.gmra.mrb[0].mxu0 %v435
      %v780 = vpop.f32.mrb[0].mxu0
      %v781 = vadd.f32 %v299, %v780
      %v782 = vpop.f32.mrb[0].mxu0
      %783 = vmatprep.mubr.f32.mxu0 0.0
      %784 = vmatmul.mubr.f32.gmra.mrb[0].mxu0 %v438
      %v785 = vpop.f32.mrb[0].mxu0
      %v786 = vadd.f32 %v299, %v785
      %v787 = vpop.f32.mrb[0].mxu0
      %788 = vmatprep.mubr.f32.mxu0 0.0
      %789 = vmatmul.mubr.f32.gmra.mrb[0].mxu0 %v441
      %v790 = vpop.f32.mrb[0].mxu0
      %v791 = vadd.f32 %v299, %v790
      %v792 = vpop.f32.mrb[0].mxu0
      %793 = vmatprep.mubr.f32.mxu0 0.0
      %794 = vmatmul.mubr.f32.gmra.mrb[0].mxu0 %v444
      %v795 = vpop.f32.mrb[0].mxu0
      %v796 = vadd.f32 %v299, %v795
      %v797 = vpop.f32.mrb[0].mxu0
      %798 = vmatprep.mubr.f32.mxu0 0.0
      %799 = vmatmul.mubr.f32.gmra.mrb[0].mxu0 %v447
      %v800 = vpop.f32.mrb[0].mxu0
      %v801 = vadd.f32 %v299, %v800
      %v802 = vpop.f32.mrb[0].mxu0
      %803 = vmatprep.mubr.f32.mxu0 0.0
      %804 = vmatmul.mubr.f32.gmra.mrb[0].mxu0 %v450
      %v805 = vpop.f32.mrb[0].mxu0
      %v806 = vadd.f32 %v299, %v805
      %v807 = vpop.f32.mrb[0].mxu0
      %808 = vmatprep.mubr.f32.mxu0 0.0
      %809 = vmatmul.mubr.f32.gmra.mrb[0].mxu0 %v453
      %v810 = vpop.f32.mrb[0].mxu0
      %v811 = vadd.f32 %v299, %v810
      %v812 = vpop.f32.mrb[0].mxu0
      %813 = vmatprep.mubr.f32.mxu0 0.0
      %814 = vmatmul.mubr.f32.gmra.mrb[0].mxu0 %v456
      %v815 = vpop.f32.mrb[0].mxu0
      %v816 = vadd.f32 %v299, %v815
      %v817 = vpop.f32.mrb[0].mxu0
      %818 = vmatprep.mubr.f32.mxu0 0.0
      %819 = vmatmul.mubr.f32.gmra.mrb[0].mxu0 %v459
      %v820 = vpop.f32.mrb[0].mxu0
      %v821 = vadd.f32 %v299, %v820
      %v822 = vpop.f32.mrb[0].mxu0
      %823 = vmatprep.mubr.f32.mxu0 0.0
      %824 = vmatmul.mubr.f32.gmra.mrb[0].mxu0 %v462
      %v825 = vpop.f32.mrb[0].mxu0
      %v826 = vadd.f32 %v299, %v825
      %v827 = vpop.f32.mrb[0].mxu0
      %828 = vmatprep.mubr.f32.mxu0 0.0
      %829 = vmatmul.mubr.f32.gmra.mrb[0].mxu0 %v465
      %v830 = vpop.f32.mrb[0].mxu0
      %v831 = vadd.f32 %v299, %v830
      %v832 = vpop.f32.mrb[0].mxu0
      %833 = vmatprep.mubr.f32.mxu0 0.0
      %834 = vmatmul.mubr.f32.gmra.mrb[0].mxu0 %v468
      %v835 = vpop.f32.mrb[0].mxu0
      %v836 = vadd.f32 %v299, %v835
      %v837 = vpop.f32.mrb[0].mxu0
      %838 = vmatprep.mubr.f32.mxu0 0.0
      %839 = vmatmul.mubr.f32.gmra.mrb[0].mxu0 %v471
      %v840 = vpop.f32.mrb[0].mxu0
      %v841 = vadd.f32 %v299, %v840
      %v842 = vpop.f32.mrb[0].mxu0
      %843 = vmatprep.mubr.f32.mxu0 0.0
      %844 = vmatmul.mubr.f32.gmra.mrb[0].mxu0 %v474
      %v845 = vpop.f32.mrb[0].mxu0
      %v846 = vadd.f32 %v299, %v845
      %v847 = vpop.f32.mrb[0].mxu0
      %848 = vmatprep.mubr.f32.mxu0 0.0
      %849 = vmatmul.mubr.f32.gmra.mrb[0].mxu0 %v477
      %v850 = vpop.f32.mrb[0].mxu0
      %v851 = vadd.f32 %v299, %v850
      %v852 = vpop.f32.mrb[0].mxu0
      %853 = vmatprep.mubr.f32.mxu0 0.0
      %854 = vmatmul.mubr.f32.gmra.mrb[0].mxu0 %v480
      %v855 = vpop.f32.mrb[0].mxu0
      %v856 = vadd.f32 %v299, %v855
      %v857 = vpop.f32.mrb[0].mxu0
      %858 = vmatprep.mubr.f32.mxu0 0.0
      %859 = vmatmul.mubr.f32.gmra.mrb[0].mxu0 %v483
      %v860 = vpop.f32.mrb[0].mxu0
      %v861 = vadd.f32 %v299, %v860
      %v862 = vpop.f32.mrb[0].mxu0
      %863 = vmatprep.mubr.f32.mxu0 0.0
      %864 = vmatmul.mubr.f32.gmra.mrb[0].mxu0 %v486
      %v865 = vpop.f32.mrb[0].mxu0
      %v866 = vadd.f32 %v299, %v865
      %v867 = vpop.f32.mrb[0].mxu0
      %868 = vmatprep.mubr.f32.mxu0 0.0
      %869 = vmatmul.mubr.f32.gmra.mrb[0].mxu0 %v489
      %v870 = vpop.f32.mrb[0].mxu0
      %v871 = vadd.f32 %v299, %v870
      %v872 = vpop.f32.mrb[0].mxu0
      %873 = vmatprep.mubr.f32.mxu0 0.0
      %874 = vmatmul.mubr.f32.gmra.mrb[0].mxu0 %v492
      %v875 = vpop.f32.mrb[0].mxu0
      %v876 = vadd.f32 %v299, %v875
      %v877 = vpop.f32.mrb[0].mxu0
      %878 = vdwg.mxu0
      %v879 = vmax.f32 %v561, 0.0
      %v880 = vmax.f32 %v566, 0.0
      %v881 = vmax.f32 %v571, 0.0
      %v882 = vmax.f32 %v576, 0.0
      %v883 = vmax.f32 %v581, 0.0
      %v884 = vmax.f32 %v586, 0.0
      %v885 = vmax.f32 %v591, 0.0
      %v886 = vmax.f32 %v596, 0.0
      %v887 = vmax.f32 %v601, 0.0
      %v888 = vmax.f32 %v606, 0.0
      %v889 = vmax.f32 %v611, 0.0
      %v890 = vmax.f32 %v616, 0.0
      %v891 = vmax.f32 %v621, 0.0
      %v892 = vmax.f32 %v626, 0.0
      %v893 = vmax.f32 %v631, 0.0
      %v894 = vmax.f32 %v636, 0.0
      %v895 = vmax.f32 %v641, 0.0
      %v896 = vmax.f32 %v646, 0.0
      %v897 = vmax.f32 %v651, 0.0
      %v898 = vmax.f32 %v656, 0.0
      %v899 = vmax.f32 %v661, 0.0
      %v900 = vmax.f32 %v666, 0.0
      %v901 = vmax.f32 %v671, 0.0
      %v902 = vmax.f32 %v676, 0.0
      %v903 = vmax.f32 %v681, 0.0
      %v904 = vmax.f32 %v686, 0.0
      %v905 = vmax.f32 %v691, 0.0
      %v906 = vmax.f32 %v696, 0.0
      %v907 = vmax.f32 %v701, 0.0
      %v908 = vmax.f32 %v706, 0.0
      %v909 = vmax.f32 %v711, 0.0
      %v910 = vmax.f32 %v716, 0.0
      %v911 = vmax.f32 %v721, 0.0
      %v912 = vmax.f32 %v726, 0.0
      %v913 = vmax.f32 %v731, 0.0
      %v914 = vmax.f32 %v736, 0.0
      %v915 = vmax.f32 %v741, 0.0
      %v916 = vmax.f32 %v746, 0.0
      %v917 = vmax.f32 %v751, 0.0
      %v918 = vmax.f32 %v756, 0.0
      %v919 = vmax.f32 %v761, 0.0
      %v920 = vmax.f32 %v766, 0.0
      %v921 = vmax.f32 %v771, 0.0
      %v922 = vmax.f32 %v776, 0.0
      %v923 = vmax.f32 %v781, 0.0
      %v924 = vmax.f32 %v786, 0.0
      %v925 = vmax.f32 %v791, 0.0
      %v926 = vmax.f32 %v796, 0.0
      %v927 = vmax.f32 %v801, 0.0
      %v928 = vmax.f32 %v806, 0.0
      %v929 = vmax.f32 %v811, 0.0
      %v930 = vmax.f32 %v816, 0.0
      %v931 = vmax.f32 %v821, 0.0
      %v932 = vmax.f32 %v826, 0.0
      %v933 = vmax.f32 %v831, 0.0
      %v934 = vmax.f32 %v836, 0.0
      %v935 = vmax.f32 %v841, 0.0
      %v936 = vmax.f32 %v846, 0.0
      %v937 = vmax.f32 %v851, 0.0
      %v938 = vmax.f32 %v856, 0.0
      %v939 = vmax.f32 %v861, 0.0
      %v940 = vmax.f32 %v866, 0.0
      %v941 = vmax.f32 %v871, 0.0
      %v942 = vmax.f32 %v876, 0.0
      %v943 = vld [vmem:[%s3] sm:$0xff]
      %v944 = vld [vmem:[%s3 + $0x8] sm:$0xff]
      %v945 = vld [vmem:[%s3 + $0x10] sm:$0xff]
      %v946 = vld [vmem:[%s3 + $0x18] sm:$0xff]
      %v947 = vld [vmem:[%s4] sm:$0x1]
      %v949 = vlaneseq
      %v950 = vshrl.u32 %v949, 7
      %v951 = vsub.s32 0, %v950
      %v952 = vrot.slane %v947, %v951
      %vm954 = vcmask 261120
      %v956 = vsel %vm954, %v879, 0
      %v959 = vsel %vm954, %v880, 0
      %v962 = vsel %vm954, %v881, 0
      %v965 = vsel %vm954, %v882, 0
      %v968 = vsel %vm954, %v883, 0
      %v971 = vsel %vm954, %v884, 0
      %v974 = vsel %vm954, %v885, 0
      %v977 = vsel %vm954, %v886, 0
      %v980 = vsel %vm954, %v887, 0
      %v983 = vsel %vm954, %v888, 0
      %v986 = vsel %vm954, %v889, 0
      %v989 = vsel %vm954, %v890, 0
      %v992 = vsel %vm954, %v891, 0
      %v995 = vsel %vm954, %v892, 0
      %v998 = vsel %vm954, %v893, 0
      %v1001 = vsel %vm954, %v894, 0
      %v1004 = vsel %vm954, %v895, 0
      %v1007 = vsel %vm954, %v896, 0
      %v1010 = vsel %vm954, %v897, 0
      %v1013 = vsel %vm954, %v898, 0
      %v1016 = vsel %vm954, %v899, 0
      %v1019 = vsel %vm954, %v900, 0
      %v1022 = vsel %vm954, %v901, 0
      %v1025 = vsel %vm954, %v902, 0
      %v1028 = vsel %vm954, %v903, 0
      %v1031 = vsel %vm954, %v904, 0
      %v1034 = vsel %vm954, %v905, 0
      %v1037 = vsel %vm954, %v906, 0
      %v1040 = vsel %vm954, %v907, 0
      %v1043 = vsel %vm954, %v908, 0
      %v1046 = vsel %vm954, %v909, 0
      %v1049 = vsel %vm954, %v910, 0
      %v1052 = vsel %vm954, %v911, 0
      %v1055 = vsel %vm954, %v912, 0
      %v1058 = vsel %vm954, %v913, 0
      %v1061 = vsel %vm954, %v914, 0
      %v1064 = vsel %vm954, %v915, 0
      %v1067 = vsel %vm954, %v916, 0
      %v1070 = vsel %vm954, %v917, 0
      %v1073 = vsel %vm954, %v918, 0
      %v1076 = vsel %vm954, %v919, 0
      %v1079 = vsel %vm954, %v920, 0
      %v1082 = vsel %vm954, %v921, 0
      %v1085 = vsel %vm954, %v922, 0
      %v1088 = vsel %vm954, %v923, 0
      %v1091 = vsel %vm954, %v924, 0
      %v1094 = vsel %vm954, %v925, 0
      %v1097 = vsel %vm954, %v926, 0
      %v1100 = vsel %vm954, %v927, 0
      %v1103 = vsel %vm954, %v928, 0
      %v1106 = vsel %vm954, %v929, 0
      %v1109 = vsel %vm954, %v930, 0
      %v1112 = vsel %vm954, %v931, 0
      %v1115 = vsel %vm954, %v932, 0
      %v1118 = vsel %vm954, %v933, 0
      %v1121 = vsel %vm954, %v934, 0
      %v1124 = vsel %vm954, %v935, 0
      %v1127 = vsel %vm954, %v936, 0
      %v1130 = vsel %vm954, %v937, 0
      %v1133 = vsel %vm954, %v938, 0
      %v1136 = vsel %vm954, %v939, 0
      %v1139 = vsel %vm954, %v940, 0
      %v1142 = vsel %vm954, %v941, 0
      %v1145 = vsel %vm954, %v942, 0
      %1147 = vmatprep.subr.mxu0 0.0
      %1148 = vmatpush1.msra.mxu0 %v943
      %1149 = vmatprep.subr.mxu0 0.0
      %1150 = vmatpush1.msra.mxu0 %v944
      %1151 = vmatprep.subr.mxu0 0.0
      %1152 = vmatpush1.msra.mxu0 %v945
      %1153 = vmatprep.subr.mxu0 0.0
      %1154 = vmatpush1.msra.mxu0 %v946
      %1155 = vmatprep.subr.mxu0 0.0
      %1156 = vmatpush1.msra.mxu0 0.0
      %1157 = vmatprep.subr.mxu0 0.0
      %1158 = vmatpush1.msra.mxu0 0.0
      %1159 = vmatprep.subr.mxu0 0.0
      %1160 = vmatpush1.msra.mxu0 0.0
      %1161 = vmatprep.subr.mxu0 0.0
      %1162 = vmatpush1.msra.mxu0 0.0
      %1163 = vmatprep.subr.mxu0 0.0
      %1164 = vmatpush1.msra.mxu0 0.0
      %1165 = vmatprep.subr.mxu0 0.0
      %1166 = vmatpush1.msra.mxu0 0.0
      %1167 = vmatprep.subr.mxu0 0.0
      %1168 = vmatpush1.msra.mxu0 0.0
      %1169 = vmatprep.subr.mxu0 0.0
      %1170 = vmatpush1.msra.mxu0 0.0
      %1171 = vmatprep.subr.mxu0 0.0
      %1172 = vmatpush1.msra.mxu0 0.0
      %1173 = vmatprep.subr.mxu0 0.0
      %1174 = vmatpush1.msra.mxu0 0.0
      %1175 = vmatprep.subr.mxu0 0.0
      %1176 = vmatpush1.msra.mxu0 0.0
      %1177 = vmatprep.subr.mxu0 0.0
      %1178 = vmatpush1.msra.mxu0 0.0
      %1179 = vmatprep.subr.mxu0 0.0
      %1180 = vmatpush1.msra.mxu0 0.0
      %1181 = vmatprep.subr.mxu0 0.0
      %1182 = vmatpush1.msra.mxu0 0.0
      %1183 = vmatprep.subr.mxu0 0.0
      %1184 = vmatpush1.msra.mxu0 0.0
      %1185 = vmatprep.subr.mxu0 0.0
      %1186 = vmatpush1.msra.mxu0 0.0
      %1187 = vmatprep.subr.mxu0 0.0
      %1188 = vmatpush1.msra.mxu0 0.0
      %1189 = vmatprep.subr.mxu0 0.0
      %1190 = vmatpush1.msra.mxu0 0.0
      %1191 = vmatprep.subr.mxu0 0.0
      %1192 = vmatpush1.msra.mxu0 0.0
      %1193 = vmatprep.subr.mxu0 0.0
      %1194 = vmatpush1.msra.mxu0 0.0
      %1195 = vmatprep.subr.mxu0 0.0
      %1196 = vmatpush1.msra.mxu0 0.0
      %1197 = vmatprep.subr.mxu0 0.0
      %1198 = vmatpush1.msra.mxu0 0.0
      %1199 = vmatprep.subr.mxu0 0.0
      %1200 = vmatpush1.msra.mxu0 0.0
      %1201 = vmatprep.subr.mxu0 0.0
      %1202 = vmatpush1.msra.mxu0 0.0
      %1203 = vmatprep.subr.mxu0 0.0
      %1204 = vmatpush1.msra.mxu0 0.0
      %1205 = vmatprep.subr.mxu0 0.0
      %1206 = vmatpush1.msra.mxu0 0.0
      %1207 = vmatprep.subr.mxu0 0.0
      %1208 = vmatpush1.msra.mxu0 0.0
      %1209 = vmatprep.subr.mxu0 0.0
      %1210 = vmatpush1.msra.mxu0 0.0
      %1211 = vmatprep.mubr.f32.mxu0 0.0
      %1212 = vmatmul.mubr.f32.gmra.mrb[0].mxu0 %v956
      %v1213 = vpop.f32.mrb[0].mxu0
      %v1214 = vadd.f32 %v952, %v1213
      %v1215 = vpop.f32.mrb[0].mxu0
      %1216 = vmatprep.mubr.f32.mxu0 0.0
      %1217 = vmatmul.mubr.f32.gmra.mrb[0].mxu0 %v959
      %v1218 = vpop.f32.mrb[0].mxu0
      %v1219 = vadd.f32 %v952, %v1218
      %v1220 = vpop.f32.mrb[0].mxu0
      %1221 = vmatprep.mubr.f32.mxu0 0.0
      %1222 = vmatmul.mubr.f32.gmra.mrb[0].mxu0 %v962
      %v1223 = vpop.f32.mrb[0].mxu0
      %v1224 = vadd.f32 %v952, %v1223
      %v1225 = vpop.f32.mrb[0].mxu0
      %1226 = vmatprep.mubr.f32.mxu0 0.0
      %1227 = vmatmul.mubr.f32.gmra.mrb[0].mxu0 %v965
      %v1228 = vpop.f32.mrb[0].mxu0
      %v1229 = vadd.f32 %v952, %v1228
      %v1230 = vpop.f32.mrb[0].mxu0
      %1231 = vmatprep.mubr.f32.mxu0 0.0
      %1232 = vmatmul.mubr.f32.gmra.mrb[0].mxu0 %v968
      %v1233 = vpop.f32.mrb[0].mxu0
      %v1234 = vadd.f32 %v952, %v1233
      %v1235 = vpop.f32.mrb[0].mxu0
      %1236 = vmatprep.mubr.f32.mxu0 0.0
      %1237 = vmatmul.mubr.f32.gmra.mrb[0].mxu0 %v971
      %v1238 = vpop.f32.mrb[0].mxu0
      %v1239 = vadd.f32 %v952, %v1238
      %v1240 = vpop.f32.mrb[0].mxu0
      %1241 = vmatprep.mubr.f32.mxu0 0.0
      %1242 = vmatmul.mubr.f32.gmra.mrb[0].mxu0 %v974
      %v1243 = vpop.f32.mrb[0].mxu0
      %v1244 = vadd.f32 %v952, %v1243
      %v1245 = vpop.f32.mrb[0].mxu0
      %1246 = vmatprep.mubr.f32.mxu0 0.0
      %1247 = vmatmul.mubr.f32.gmra.mrb[0].mxu0 %v977
      %v1248 = vpop.f32.mrb[0].mxu0
      %v1249 = vadd.f32 %v952, %v1248
      %v1250 = vpop.f32.mrb[0].mxu0
      %1251 = vmatprep.mubr.f32.mxu0 0.0
      %1252 = vmatmul.mubr.f32.gmra.mrb[0].mxu0 %v980
      %v1253 = vpop.f32.mrb[0].mxu0
      %v1254 = vadd.f32 %v952, %v1253
      %v1255 = vpop.f32.mrb[0].mxu0
      %1256 = vmatprep.mubr.f32.mxu0 0.0
      %1257 = vmatmul.mubr.f32.gmra.mrb[0].mxu0 %v983
      %v1258 = vpop.f32.mrb[0].mxu0
      %v1259 = vadd.f32 %v952, %v1258
      %v1260 = vpop.f32.mrb[0].mxu0
      %1261 = vmatprep.mubr.f32.mxu0 0.0
      %1262 = vmatmul.mubr.f32.gmra.mrb[0].mxu0 %v986
      %v1263 = vpop.f32.mrb[0].mxu0
      %v1264 = vadd.f32 %v952, %v1263
      %v1265 = vpop.f32.mrb[0].mxu0
      %1266 = vmatprep.mubr.f32.mxu0 0.0
      %1267 = vmatmul.mubr.f32.gmra.mrb[0].mxu0 %v989
      %v1268 = vpop.f32.mrb[0].mxu0
      %v1269 = vadd.f32 %v952, %v1268
      %v1270 = vpop.f32.mrb[0].mxu0
      %1271 = vmatprep.mubr.f32.mxu0 0.0
      %1272 = vmatmul.mubr.f32.gmra.mrb[0].mxu0 %v992
      %v1273 = vpop.f32.mrb[0].mxu0
      %v1274 = vadd.f32 %v952, %v1273
      %v1275 = vpop.f32.mrb[0].mxu0
      %1276 = vmatprep.mubr.f32.mxu0 0.0
      %1277 = vmatmul.mubr.f32.gmra.mrb[0].mxu0 %v995
      %v1278 = vpop.f32.mrb[0].mxu0
      %v1279 = vadd.f32 %v952, %v1278
      %v1280 = vpop.f32.mrb[0].mxu0
      %1281 = vmatprep.mubr.f32.mxu0 0.0
      %1282 = vmatmul.mubr.f32.gmra.mrb[0].mxu0 %v998
      %v1283 = vpop.f32.mrb[0].mxu0
      %v1284 = vadd.f32 %v952, %v1283
      %v1285 = vpop.f32.mrb[0].mxu0
      %1286 = vmatprep.mubr.f32.mxu0 0.0
      %1287 = vmatmul.mubr.f32.gmra.mrb[0].mxu0 %v1001
      %v1288 = vpop.f32.mrb[0].mxu0
      %v1289 = vadd.f32 %v952, %v1288
      %v1290 = vpop.f32.mrb[0].mxu0
      %1291 = vmatprep.mubr.f32.mxu0 0.0
      %1292 = vmatmul.mubr.f32.gmra.mrb[0].mxu0 %v1004
      %v1293 = vpop.f32.mrb[0].mxu0
      %v1294 = vadd.f32 %v952, %v1293
      %v1295 = vpop.f32.mrb[0].mxu0
      %1296 = vmatprep.mubr.f32.mxu0 0.0
      %1297 = vmatmul.mubr.f32.gmra.mrb[0].mxu0 %v1007
      %v1298 = vpop.f32.mrb[0].mxu0
      %v1299 = vadd.f32 %v952, %v1298
      %v1300 = vpop.f32.mrb[0].mxu0
      %1301 = vmatprep.mubr.f32.mxu0 0.0
      %1302 = vmatmul.mubr.f32.gmra.mrb[0].mxu0 %v1010
      %v1303 = vpop.f32.mrb[0].mxu0
      %v1304 = vadd.f32 %v952, %v1303
      %v1305 = vpop.f32.mrb[0].mxu0
      %1306 = vmatprep.mubr.f32.mxu0 0.0
      %1307 = vmatmul.mubr.f32.gmra.mrb[0].mxu0 %v1013
      %v1308 = vpop.f32.mrb[0].mxu0
      %v1309 = vadd.f32 %v952, %v1308
      %v1310 = vpop.f32.mrb[0].mxu0
      %1311 = vmatprep.mubr.f32.mxu0 0.0
      %1312 = vmatmul.mubr.f32.gmra.mrb[0].mxu0 %v1016
      %v1313 = vpop.f32.mrb[0].mxu0
      %v1314 = vadd.f32 %v952, %v1313
      %v1315 = vpop.f32.mrb[0].mxu0
      %1316 = vmatprep.mubr.f32.mxu0 0.0
      %1317 = vmatmul.mubr.f32.gmra.mrb[0].mxu0 %v1019
      %v1318 = vpop.f32.mrb[0].mxu0
      %v1319 = vadd.f32 %v952, %v1318
      %v1320 = vpop.f32.mrb[0].mxu0
      %1321 = vmatprep.mubr.f32.mxu0 0.0
      %1322 = vmatmul.mubr.f32.gmra.mrb[0].mxu0 %v1022
      %v1323 = vpop.f32.mrb[0].mxu0
      %v1324 = vadd.f32 %v952, %v1323
      %v1325 = vpop.f32.mrb[0].mxu0
      %1326 = vmatprep.mubr.f32.mxu0 0.0
      %1327 = vmatmul.mubr.f32.gmra.mrb[0].mxu0 %v1025
      %v1328 = vpop.f32.mrb[0].mxu0
      %v1329 = vadd.f32 %v952, %v1328
      %v1330 = vpop.f32.mrb[0].mxu0
      %1331 = vmatprep.mubr.f32.mxu0 0.0
      %1332 = vmatmul.mubr.f32.gmra.mrb[0].mxu0 %v1028
      %v1333 = vpop.f32.mrb[0].mxu0
      %v1334 = vadd.f32 %v952, %v1333
      %v1335 = vpop.f32.mrb[0].mxu0
      %1336 = vmatprep.mubr.f32.mxu0 0.0
      %1337 = vmatmul.mubr.f32.gmra.mrb[0].mxu0 %v1031
      %v1338 = vpop.f32.mrb[0].mxu0
      %v1339 = vadd.f32 %v952, %v1338
      %v1340 = vpop.f32.mrb[0].mxu0
      %1341 = vmatprep.mubr.f32.mxu0 0.0
      %1342 = vmatmul.mubr.f32.gmra.mrb[0].mxu0 %v1034
      %v1343 = vpop.f32.mrb[0].mxu0
      %v1344 = vadd.f32 %v952, %v1343
      %v1345 = vpop.f32.mrb[0].mxu0
      %1346 = vmatprep.mubr.f32.mxu0 0.0
      %1347 = vmatmul.mubr.f32.gmra.mrb[0].mxu0 %v1037
      %v1348 = vpop.f32.mrb[0].mxu0
      %v1349 = vadd.f32 %v952, %v1348
      %v1350 = vpop.f32.mrb[0].mxu0
      %1351 = vmatprep.mubr.f32.mxu0 0.0
      %1352 = vmatmul.mubr.f32.gmra.mrb[0].mxu0 %v1040
      %v1353 = vpop.f32.mrb[0].mxu0
      %v1354 = vadd.f32 %v952, %v1353
      %v1355 = vpop.f32.mrb[0].mxu0
      %1356 = vmatprep.mubr.f32.mxu0 0.0
      %1357 = vmatmul.mubr.f32.gmra.mrb[0].mxu0 %v1043
      %v1358 = vpop.f32.mrb[0].mxu0
      %v1359 = vadd.f32 %v952, %v1358
      %v1360 = vpop.f32.mrb[0].mxu0
      %1361 = vmatprep.mubr.f32.mxu0 0.0
      %1362 = vmatmul.mubr.f32.gmra.mrb[0].mxu0 %v1046
      %v1363 = vpop.f32.mrb[0].mxu0
      %v1364 = vadd.f32 %v952, %v1363
      %v1365 = vpop.f32.mrb[0].mxu0
      %1366 = vmatprep.mubr.f32.mxu0 0.0
      %1367 = vmatmul.mubr.f32.gmra.mrb[0].mxu0 %v1049
      %v1368 = vpop.f32.mrb[0].mxu0
      %v1369 = vadd.f32 %v952, %v1368
      %v1370 = vpop.f32.mrb[0].mxu0
      %1371 = vmatprep.mubr.f32.mxu0 0.0
      %1372 = vmatmul.mubr.f32.gmra.mrb[0].mxu0 %v1052
      %v1373 = vpop.f32.mrb[0].mxu0
      %v1374 = vadd.f32 %v952, %v1373
      %v1375 = vpop.f32.mrb[0].mxu0
      %1376 = vmatprep.mubr.f32.mxu0 0.0
      %1377 = vmatmul.mubr.f32.gmra.mrb[0].mxu0 %v1055
      %v1378 = vpop.f32.mrb[0].mxu0
      %v1379 = vadd.f32 %v952, %v1378
      %v1380 = vpop.f32.mrb[0].mxu0
      %1381 = vmatprep.mubr.f32.mxu0 0.0
      %1382 = vmatmul.mubr.f32.gmra.mrb[0].mxu0 %v1058
      %v1383 = vpop.f32.mrb[0].mxu0
      %v1384 = vadd.f32 %v952, %v1383
      %v1385 = vpop.f32.mrb[0].mxu0
      %1386 = vmatprep.mubr.f32.mxu0 0.0
      %1387 = vmatmul.mubr.f32.gmra.mrb[0].mxu0 %v1061
      %v1388 = vpop.f32.mrb[0].mxu0
      %v1389 = vadd.f32 %v952, %v1388
      %v1390 = vpop.f32.mrb[0].mxu0
      %1391 = vmatprep.mubr.f32.mxu0 0.0
      %1392 = vmatmul.mubr.f32.gmra.mrb[0].mxu0 %v1064
      %v1393 = vpop.f32.mrb[0].mxu0
      %v1394 = vadd.f32 %v952, %v1393
      %v1395 = vpop.f32.mrb[0].mxu0
      %1396 = vmatprep.mubr.f32.mxu0 0.0
      %1397 = vmatmul.mubr.f32.gmra.mrb[0].mxu0 %v1067
      %v1398 = vpop.f32.mrb[0].mxu0
      %v1399 = vadd.f32 %v952, %v1398
      %v1400 = vpop.f32.mrb[0].mxu0
      %1401 = vmatprep.mubr.f32.mxu0 0.0
      %1402 = vmatmul.mubr.f32.gmra.mrb[0].mxu0 %v1070
      %v1403 = vpop.f32.mrb[0].mxu0
      %v1404 = vadd.f32 %v952, %v1403
      %v1405 = vpop.f32.mrb[0].mxu0
      %1406 = vmatprep.mubr.f32.mxu0 0.0
      %1407 = vmatmul.mubr.f32.gmra.mrb[0].mxu0 %v1073
      %v1408 = vpop.f32.mrb[0].mxu0
      %v1409 = vadd.f32 %v952, %v1408
      %v1410 = vpop.f32.mrb[0].mxu0
      %1411 = vmatprep.mubr.f32.mxu0 0.0
      %1412 = vmatmul.mubr.f32.gmra.mrb[0].mxu0 %v1076
      %v1413 = vpop.f32.mrb[0].mxu0
      %v1414 = vadd.f32 %v952, %v1413
      %v1415 = vpop.f32.mrb[0].mxu0
      %1416 = vmatprep.mubr.f32.mxu0 0.0
      %1417 = vmatmul.mubr.f32.gmra.mrb[0].mxu0 %v1079
      %v1418 = vpop.f32.mrb[0].mxu0
      %v1419 = vadd.f32 %v952, %v1418
      %v1420 = vpop.f32.mrb[0].mxu0
      %1421 = vmatprep.mubr.f32.mxu0 0.0
      %1422 = vmatmul.mubr.f32.gmra.mrb[0].mxu0 %v1082
      %v1423 = vpop.f32.mrb[0].mxu0
      %v1424 = vadd.f32 %v952, %v1423
      %v1425 = vpop.f32.mrb[0].mxu0
      %1426 = vmatprep.mubr.f32.mxu0 0.0
      %1427 = vmatmul.mubr.f32.gmra.mrb[0].mxu0 %v1085
      %v1428 = vpop.f32.mrb[0].mxu0
      %v1429 = vadd.f32 %v952, %v1428
      %v1430 = vpop.f32.mrb[0].mxu0
      %1431 = vmatprep.mubr.f32.mxu0 0.0
      %1432 = vmatmul.mubr.f32.gmra.mrb[0].mxu0 %v1088
      %v1433 = vpop.f32.mrb[0].mxu0
      %v1434 = vadd.f32 %v952, %v1433
      %v1435 = vpop.f32.mrb[0].mxu0
      %1436 = vmatprep.mubr.f32.mxu0 0.0
      %1437 = vmatmul.mubr.f32.gmra.mrb[0].mxu0 %v1091
      %v1438 = vpop.f32.mrb[0].mxu0
      %v1439 = vadd.f32 %v952, %v1438
      %v1440 = vpop.f32.mrb[0].mxu0
      %1441 = vmatprep.mubr.f32.mxu0 0.0
      %1442 = vmatmul.mubr.f32.gmra.mrb[0].mxu0 %v1094
      %v1443 = vpop.f32.mrb[0].mxu0
      %v1444 = vadd.f32 %v952, %v1443
      %v1445 = vpop.f32.mrb[0].mxu0
      %1446 = vmatprep.mubr.f32.mxu0 0.0
      %1447 = vmatmul.mubr.f32.gmra.mrb[0].mxu0 %v1097
      %v1448 = vpop.f32.mrb[0].mxu0
      %v1449 = vadd.f32 %v952, %v1448
      %v1450 = vpop.f32.mrb[0].mxu0
      %1451 = vmatprep.mubr.f32.mxu0 0.0
      %1452 = vmatmul.mubr.f32.gmra.mrb[0].mxu0 %v1100
      %v1453 = vpop.f32.mrb[0].mxu0
      %v1454 = vadd.f32 %v952, %v1453
      %v1455 = vpop.f32.mrb[0].mxu0
      %1456 = vmatprep.mubr.f32.mxu0 0.0
      %1457 = vmatmul.mubr.f32.gmra.mrb[0].mxu0 %v1103
      %v1458 = vpop.f32.mrb[0].mxu0
      %v1459 = vadd.f32 %v952, %v1458
      %v1460 = vpop.f32.mrb[0].mxu0
      %1461 = vmatprep.mubr.f32.mxu0 0.0
      %1462 = vmatmul.mubr.f32.gmra.mrb[0].mxu0 %v1106
      %v1463 = vpop.f32.mrb[0].mxu0
      %v1464 = vadd.f32 %v952, %v1463
      %v1465 = vpop.f32.mrb[0].mxu0
      %1466 = vmatprep.mubr.f32.mxu0 0.0
      %1467 = vmatmul.mubr.f32.gmra.mrb[0].mxu0 %v1109
      %v1468 = vpop.f32.mrb[0].mxu0
      %v1469 = vadd.f32 %v952, %v1468
      %v1470 = vpop.f32.mrb[0].mxu0
      %1471 = vmatprep.mubr.f32.mxu0 0.0
      %1472 = vmatmul.mubr.f32.gmra.mrb[0].mxu0 %v1112
      %v1473 = vpop.f32.mrb[0].mxu0
      %v1474 = vadd.f32 %v952, %v1473
      %v1475 = vpop.f32.mrb[0].mxu0
      %1476 = vmatprep.mubr.f32.mxu0 0.0
      %1477 = vmatmul.mubr.f32.gmra.mrb[0].mxu0 %v1115
      %v1478 = vpop.f32.mrb[0].mxu0
      %v1479 = vadd.f32 %v952, %v1478
      %v1480 = vpop.f32.mrb[0].mxu0
      %1481 = vmatprep.mubr.f32.mxu0 0.0
      %1482 = vmatmul.mubr.f32.gmra.mrb[0].mxu0 %v1118
      %v1483 = vpop.f32.mrb[0].mxu0
      %v1484 = vadd.f32 %v952, %v1483
      %v1485 = vpop.f32.mrb[0].mxu0
      %1486 = vmatprep.mubr.f32.mxu0 0.0
      %1487 = vmatmul.mubr.f32.gmra.mrb[0].mxu0 %v1121
      %v1488 = vpop.f32.mrb[0].mxu0
      %v1489 = vadd.f32 %v952, %v1488
      %v1490 = vpop.f32.mrb[0].mxu0
      %1491 = vmatprep.mubr.f32.mxu0 0.0
      %1492 = vmatmul.mubr.f32.gmra.mrb[0].mxu0 %v1124
      %v1493 = vpop.f32.mrb[0].mxu0
      %v1494 = vadd.f32 %v952, %v1493
      %v1495 = vpop.f32.mrb[0].mxu0
      %1496 = vmatprep.mubr.f32.mxu0 0.0
      %1497 = vmatmul.mubr.f32.gmra.mrb[0].mxu0 %v1127
      %v1498 = vpop.f32.mrb[0].mxu0
      %v1499 = vadd.f32 %v952, %v1498
      %v1500 = vpop.f32.mrb[0].mxu0
      %1501 = vmatprep.mubr.f32.mxu0 0.0
      %1502 = vmatmul.mubr.f32.gmra.mrb[0].mxu0 %v1130
      %v1503 = vpop.f32.mrb[0].mxu0
      %v1504 = vadd.f32 %v952, %v1503
      %v1505 = vpop.f32.mrb[0].mxu0
      %1506 = vmatprep.mubr.f32.mxu0 0.0
      %1507 = vmatmul.mubr.f32.gmra.mrb[0].mxu0 %v1133
      %v1508 = vpop.f32.mrb[0].mxu0
      %v1509 = vadd.f32 %v952, %v1508
      %v1510 = vpop.f32.mrb[0].mxu0
      %1511 = vmatprep.mubr.f32.mxu0 0.0
      %1512 = vmatmul.mubr.f32.gmra.mrb[0].mxu0 %v1136
      %v1513 = vpop.f32.mrb[0].mxu0
      %v1514 = vadd.f32 %v952, %v1513
      %v1515 = vpop.f32.mrb[0].mxu0
      %1516 = vmatprep.mubr.f32.mxu0 0.0
      %1517 = vmatmul.mubr.f32.gmra.mrb[0].mxu0 %v1139
      %v1518 = vpop.f32.mrb[0].mxu0
      %v1519 = vadd.f32 %v952, %v1518
      %v1520 = vpop.f32.mrb[0].mxu0
      %1521 = vmatprep.mubr.f32.mxu0 0.0
      %1522 = vmatmul.mubr.f32.gmra.mrb[0].mxu0 %v1142
      %v1523 = vpop.f32.mrb[0].mxu0
      %v1524 = vadd.f32 %v952, %v1523
      %v1525 = vpop.f32.mrb[0].mxu0
      %1526 = vmatprep.mubr.f32.mxu0 0.0
      %1527 = vmatmul.mubr.f32.gmra.mrb[0].mxu0 %v1145
      %v1528 = vpop.f32.mrb[0].mxu0
      %v1529 = vadd.f32 %v952, %v1528
      %v1530 = vpop.f32.mrb[0].mxu0
      %1531 = vdwg.mxu0
      %v1532 = vmax.f32 %v1214, 0.0
      %v1533 = vmax.f32 %v1219, 0.0
      %v1534 = vmax.f32 %v1224, 0.0
      %v1535 = vmax.f32 %v1229, 0.0
      %v1536 = vmax.f32 %v1234, 0.0
      %v1537 = vmax.f32 %v1239, 0.0
      %v1538 = vmax.f32 %v1244, 0.0
      %v1539 = vmax.f32 %v1249, 0.0
      %v1540 = vmax.f32 %v1254, 0.0
      %v1541 = vmax.f32 %v1259, 0.0
      %v1542 = vmax.f32 %v1264, 0.0
      %v1543 = vmax.f32 %v1269, 0.0
      %v1544 = vmax.f32 %v1274, 0.0
      %v1545 = vmax.f32 %v1279, 0.0
      %v1546 = vmax.f32 %v1284, 0.0
      %v1547 = vmax.f32 %v1289, 0.0
      %v1548 = vmax.f32 %v1294, 0.0
      %v1549 = vmax.f32 %v1299, 0.0
      %v1550 = vmax.f32 %v1304, 0.0
      %v1551 = vmax.f32 %v1309, 0.0
      %v1552 = vmax.f32 %v1314, 0.0
      %v1553 = vmax.f32 %v1319, 0.0
      %v1554 = vmax.f32 %v1324, 0.0
      %v1555 = vmax.f32 %v1329, 0.0
      %v1556 = vmax.f32 %v1334, 0.0
      %v1557 = vmax.f32 %v1339, 0.0
      %v1558 = vmax.f32 %v1344, 0.0
      %v1559 = vmax.f32 %v1349, 0.0
      %v1560 = vmax.f32 %v1354, 0.0
      %v1561 = vmax.f32 %v1359, 0.0
      %v1562 = vmax.f32 %v1364, 0.0
      %v1563 = vmax.f32 %v1369, 0.0
      %v1564 = vmax.f32 %v1374, 0.0
      %v1565 = vmax.f32 %v1379, 0.0
      %v1566 = vmax.f32 %v1384, 0.0
      %v1567 = vmax.f32 %v1389, 0.0
      %v1568 = vmax.f32 %v1394, 0.0
      %v1569 = vmax.f32 %v1399, 0.0
      %v1570 = vmax.f32 %v1404, 0.0
      %v1571 = vmax.f32 %v1409, 0.0
      %v1572 = vmax.f32 %v1414, 0.0
      %v1573 = vmax.f32 %v1419, 0.0
      %v1574 = vmax.f32 %v1424, 0.0
      %v1575 = vmax.f32 %v1429, 0.0
      %v1576 = vmax.f32 %v1434, 0.0
      %v1577 = vmax.f32 %v1439, 0.0
      %v1578 = vmax.f32 %v1444, 0.0
      %v1579 = vmax.f32 %v1449, 0.0
      %v1580 = vmax.f32 %v1454, 0.0
      %v1581 = vmax.f32 %v1459, 0.0
      %v1582 = vmax.f32 %v1464, 0.0
      %v1583 = vmax.f32 %v1469, 0.0
      %v1584 = vmax.f32 %v1474, 0.0
      %v1585 = vmax.f32 %v1479, 0.0
      %v1586 = vmax.f32 %v1484, 0.0
      %v1587 = vmax.f32 %v1489, 0.0
      %v1588 = vmax.f32 %v1494, 0.0
      %v1589 = vmax.f32 %v1499, 0.0
      %v1590 = vmax.f32 %v1504, 0.0
      %v1591 = vmax.f32 %v1509, 0.0
      %v1592 = vmax.f32 %v1514, 0.0
      %v1593 = vmax.f32 %v1519, 0.0
      %v1594 = vmax.f32 %v1524, 0.0
      %v1595 = vmax.f32 %v1529, 0.0
      %1596 = vst.msk [vmem:[%s226] sm:$0xff] %vm954, %v1532
      %1597 = vst.msk [vmem:[%s226 + $0x8] sm:$0xff] %vm954, %v1533
      %1598 = vst.msk [vmem:[%s226 + $0x10] sm:$0xff] %vm954, %v1534
      %1599 = vst.msk [vmem:[%s226 + $0x18] sm:$0xff] %vm954, %v1535
      %1600 = vst.msk [vmem:[%s226 + $0x20] sm:$0xff] %vm954, %v1536
      %1601 = vst.msk [vmem:[%s226 + $0x28] sm:$0xff] %vm954, %v1537
      %1602 = vst.msk [vmem:[%s226 + $0x30] sm:$0xff] %vm954, %v1538
      %1603 = vst.msk [vmem:[%s226 + $0x38] sm:$0xff] %vm954, %v1539
      %1604 = vst.msk [vmem:[%s226 + $0x40] sm:$0xff] %vm954, %v1540
      %1605 = vst.msk [vmem:[%s226 + $0x48] sm:$0xff] %vm954, %v1541
      %1606 = vst.msk [vmem:[%s226 + $0x50] sm:$0xff] %vm954, %v1542
      %1607 = vst.msk [vmem:[%s226 + $0x58] sm:$0xff] %vm954, %v1543
      %1608 = vst.msk [vmem:[%s226 + $0x60] sm:$0xff] %vm954, %v1544
      %1609 = vst.msk [vmem:[%s226 + $0x68] sm:$0xff] %vm954, %v1545
      %1610 = vst.msk [vmem:[%s226 + $0x70] sm:$0xff] %vm954, %v1546
      %1611 = vst.msk [vmem:[%s226 + $0x78] sm:$0xff] %vm954, %v1547
      %1612 = vst.msk [vmem:[%s226 + $0x80] sm:$0xff] %vm954, %v1548
      %1613 = vst.msk [vmem:[%s226 + $0x88] sm:$0xff] %vm954, %v1549
      %1614 = vst.msk [vmem:[%s226 + $0x90] sm:$0xff] %vm954, %v1550
      %1615 = vst.msk [vmem:[%s226 + $0x98] sm:$0xff] %vm954, %v1551
      %1616 = vst.msk [vmem:[%s226 + $0xa0] sm:$0xff] %vm954, %v1552
      %1617 = vst.msk [vmem:[%s226 + $0xa8] sm:$0xff] %vm954, %v1553
      %1618 = vst.msk [vmem:[%s226 + $0xb0] sm:$0xff] %vm954, %v1554
      %1619 = vst.msk [vmem:[%s226 + $0xb8] sm:$0xff] %vm954, %v1555
      %1620 = vst.msk [vmem:[%s226 + $0xc0] sm:$0xff] %vm954, %v1556
      %1621 = vst.msk [vmem:[%s226 + $0xc8] sm:$0xff] %vm954, %v1557
      %1622 = vst.msk [vmem:[%s226 + $0xd0] sm:$0xff] %vm954, %v1558
      %1623 = vst.msk [vmem:[%s226 + $0xd8] sm:$0xff] %vm954, %v1559
      %1624 = vst.msk [vmem:[%s226 + $0xe0] sm:$0xff] %vm954, %v1560
      %1625 = vst.msk [vmem:[%s226 + $0xe8] sm:$0xff] %vm954, %v1561
      %1626 = vst.msk [vmem:[%s226 + $0xf0] sm:$0xff] %vm954, %v1562
      %1627 = vst.msk [vmem:[%s226 + $0xf8] sm:$0xff] %vm954, %v1563
      %1628 = vst.msk [vmem:[%s226 + $0x100] sm:$0xff] %vm954, %v1564
      %1629 = vst.msk [vmem:[%s226 + $0x108] sm:$0xff] %vm954, %v1565
      %1630 = vst.msk [vmem:[%s226 + $0x110] sm:$0xff] %vm954, %v1566
      %1631 = vst.msk [vmem:[%s226 + $0x118] sm:$0xff] %vm954, %v1567
      %1632 = vst.msk [vmem:[%s226 + $0x120] sm:$0xff] %vm954, %v1568
      %1633 = vst.msk [vmem:[%s226 + $0x128] sm:$0xff] %vm954, %v1569
      %1634 = vst.msk [vmem:[%s226 + $0x130] sm:$0xff] %vm954, %v1570
      %1635 = vst.msk [vmem:[%s226 + $0x138] sm:$0xff] %vm954, %v1571
      %1636 = vst.msk [vmem:[%s226 + $0x140] sm:$0xff] %vm954, %v1572
      %1637 = vst.msk [vmem:[%s226 + $0x148] sm:$0xff] %vm954, %v1573
      %1638 = vst.msk [vmem:[%s226 + $0x150] sm:$0xff] %vm954, %v1574
      %1639 = vst.msk [vmem:[%s226 + $0x158] sm:$0xff] %vm954, %v1575
      %1640 = vst.msk [vmem:[%s226 + $0x160] sm:$0xff] %vm954, %v1576
      %1641 = vst.msk [vmem:[%s226 + $0x168] sm:$0xff] %vm954, %v1577
      %1642 = vst.msk [vmem:[%s226 + $0x170] sm:$0xff] %vm954, %v1578
      %1643 = vst.msk [vmem:[%s226 + $0x178] sm:$0xff] %vm954, %v1579
      %1644 = vst.msk [vmem:[%s226 + $0x180] sm:$0xff] %vm954, %v1580
      %1645 = vst.msk [vmem:[%s226 + $0x188] sm:$0xff] %vm954, %v1581
      %1646 = vst.msk [vmem:[%s226 + $0x190] sm:$0xff] %vm954, %v1582
      %1647 = vst.msk [vmem:[%s226 + $0x198] sm:$0xff] %vm954, %v1583
      %1648 = vst.msk [vmem:[%s226 + $0x1a0] sm:$0xff] %vm954, %v1584
      %1649 = vst.msk [vmem:[%s226 + $0x1a8] sm:$0xff] %vm954, %v1585
      %1650 = vst.msk [vmem:[%s226 + $0x1b0] sm:$0xff] %vm954, %v1586
      %1651 = vst.msk [vmem:[%s226 + $0x1b8] sm:$0xff] %vm954, %v1587
      %1652 = vst.msk [vmem:[%s226 + $0x1c0] sm:$0xff] %vm954, %v1588
      %1653 = vst.msk [vmem:[%s226 + $0x1c8] sm:$0xff] %vm954, %v1589
      %1654 = vst.msk [vmem:[%s226 + $0x1d0] sm:$0xff] %vm954, %v1590
      %1655 = vst.msk [vmem:[%s226 + $0x1d8] sm:$0xff] %vm954, %v1591
      %1656 = vst.msk [vmem:[%s226 + $0x1e0] sm:$0xff] %vm954, %v1592
      %1657 = vst.msk [vmem:[%s226 + $0x1e8] sm:$0xff] %vm954, %v1593
      %1658 = vst.msk [vmem:[%s226 + $0x1f0] sm:$0xff] %vm954, %v1594
      %1659 = vst.msk [vmem:[%s226 + $0x1f8] sm:$0xff] %vm954, %v1595
      %s1660 = smul.u32 64, %s16
      %p1661 = scmp.lt.s32.totalorder %s1660, 127
      %s1662 = scalar_select %p1661, %s1660, 127
      %s1663 = smul.addr %s1662, 8
      %s1664 = scalar_lea.vmem %s5, %s1663
      // Predicated region
      $region41: #{tpu_custom_call.1} parent=39 // pred_check
        %p1665 = pneg %p144
      $region42: #{tpu_custom_call.1} parent=39 // pred_check_branch
        %1667 = sbr.rel (%p1665) target = $region44
      $region43: #{tpu_custom_call.1} parent=39 // pred_region
        %s1668 = smul.u32 64, %s16
      $region44: #{tpu_custom_call.1} parent=39 // pred_fallthru
        _
    $region40: #{tpu_custom_call.1} parent=5 // pred_fallthru
      _
    %p1669 = scmp.le.s32.totalorder 2, %s11
    // Predicated region
    $region45: #{tpu_custom_call.1} parent=5 // pred_check
      %p1670 = pneg %p1669
    $region46: #{tpu_custom_call.1} parent=5 // pred_check_branch
      %1672 = sbr.rel (%p1670) target = $region48
    $region47: #{tpu_custom_call.1} parent=5 // pred_region
      %s1673 = ssub.s32 %s11, 2
      // Predicated region
      $region49: #{tpu_custom_call.1} parent=47 // pred_check
        %p1674 = pneg %p150
      $region50: #{tpu_custom_call.1} parent=47 // pred_check_branch
        %1676 = sbr.rel (%p1674) target = $region52
      $region51: #{tpu_custom_call.1} parent=47 // pred_region
        %s1677 = smul.u32 64, %s17
        %p1678 = scmp.lt.s32.totalorder %s1677, 127
        %s1679 = scalar_select %p1678, %s1677, 127
        %s1680 = smul.addr %s1679, 8
        %s1681 = scalar_lea.vmem %s5, %s1680
      $region52: #{tpu_custom_call.1} parent=47 // pred_fallthru
        _
    $region48: #{tpu_custom_call.1} parent=5 // pred_fallthru
      _
  $region6: #{tpu_custom_call.1} parent=0 // loop_footer
    %s15 = sadd.s32 1, %s11
  $region7: #{tpu_custom_call.1} parent=0 // loop_footer_branch
    %10 = sbr.rel target = $region3
  $region8: #{tpu_custom_call.1} parent=0 // loop_exit
    _

</llo_original>
